<compile_context>
chip_gen: v7x
topology: tpu7x:2x2x1
jax: 0.10.0
libtpu: 0.0.40
codegen_flags: <defaults>
</compile_context>

<pallas_src>
import functools

import jax
import jax.numpy as jnp
import numpy as np
from jax import lax
from jax.experimental import pallas as pl
from jax.experimental.pallas import tpu as pltpu

# --- constants standing in for the module's settings import ---------------
OBS_SHAPE = 24              # per-timestep observation width
MCTS_RNN_HIDDENS = 32       # GRU hidden size
N_ACTIONS = 4               # fold / check / call / bet-raise style action slots
N_BET_BUCKETS = 8           # bet head width
VALID_ACTIONS = list(range(10, 10 + N_ACTIONS))   # obs indices holding action-valid bits
ACTIONS_START = VALID_ACTIONS[0]
ACTIONS_END = VALID_ACTIONS[-1]
VALID_BET_LOW = 14
VALID_BET_HIGH = 15
POT_SIZE = 16
BET_BUCKETS = [0.25, 0.5, 0.75, 1.0, 2.0]         # N_BET_BUCKETS - 3 pot fractions
NULL_VALUE = -100000.0

# --- TPU layout constants ---------------------------------------------------
LANE = 128
HP = 128                    # padded per-gate / hidden lane width
DP = 128                    # padded observation width
OUT_W = 128                 # lane-dense output slab width
VALUE_COL = N_ACTIONS + N_BET_BUCKETS   # column 12 of the fused head


def _log_softmax(v):
    m = jnp.max(v, axis=1, keepdims=True)
    s = v - m
    return s - jnp.log(jnp.sum(jnp.exp(s), axis=1, keepdims=True))


def evaluator_kernel(x_ref, starts_ref, w_ih_ref, w_hh_ref, b_ih_ref, b_hh_ref,
                     w_heads_ref, b_heads_ref, buckets_ref,
                     out_ref, gi_ref):
    T, B, DPk = x_ref.shape
    HPk = w_hh_ref.shape[0]             # 128 (padded hidden)
    G = 3 * HPk                         # lane-aligned gate axis

    starts = starts_ref[...]            # (B, 1) int32 sequence lengths (>= 1)
    x_all = x_ref[...]                  # (T, B, DP)

    # ---- input projection hoisted out of the recurrence: one MXU matmul ----
    gi = jnp.dot(x_all.reshape(T * B, DPk), w_ih_ref[...],
                 preferred_element_type=jnp.float32) + b_ih_ref[...]
    gi_ref[...] = gi.reshape(T, B, G)

    # ---- last valid observation x[b, starts[b]-1, :]  (off the serial path) ----
    last_obs = jnp.zeros((B, DPk), jnp.float32)
    for t in range(T):                                    # static unrolled, epilogue-free
        last_obs = jnp.where((t + 1) == starts, x_all[t], last_obs)

    w_hh = w_hh_ref[...]
    b_hh = jnp.broadcast_to(b_hh_ref[...], (B, G))        # broadcast hoisted out of loop

    # ---- serial GRU recurrence (only h @ W_hh on the critical chain) ----
    def step(t, h):
        gi_t = gi_ref[t]                                  # (B, 3*HP) lane-aligned gates
        gh = jnp.dot(h, w_hh, preferred_element_type=jnp.float32) + b_hh
        r = jax.nn.sigmoid(gi_t[:, 0:HPk] + gh[:, 0:HPk])
        z = jax.nn.sigmoid(gi_t[:, HPk:2 * HPk] + gh[:, HPk:2 * HPk])
        n = jnp.tanh(gi_t[:, 2 * HPk:] + r * gh[:, 2 * HPk:])
        h_new = (1.0 - z) * n + z * h
        # pack_padded_sequence semantics: only update while t < starts[b]
        return jnp.where(t < starts, h_new, h)

    h = lax.fori_loop(0, T, step, jnp.zeros((B, HPk), jnp.float32), unroll=True)

    # ---- fused heads: action | bet | value in one (HP, 128) matmul ----
    heads = jnp.dot(h, w_heads_ref[...],
                    preferred_element_type=jnp.float32) + b_heads_ref[...]
    action = heads[:, 0:N_ACTIONS]
    bet = heads[:, N_ACTIONS:N_ACTIONS + N_BET_BUCKETS]
    value = heads[:, VALUE_COL:VALUE_COL + 1]

    # action masking (NULL_VALUE sentinel, then all-null -> zeros)
    invalid_actions = last_obs[:, ACTIONS_START:ACTIONS_END + 1] == 0.0   # (B, 4)
    action = jnp.where(invalid_actions, NULL_VALUE, action)
    all_null_a = jnp.all(action == NULL_VALUE, axis=1, keepdims=True)
    action = jnp.where(all_null_a, 0.0, action)

    # bet-size masking
    low = last_obs[:, VALID_BET_LOW:VALID_BET_LOW + 1]                    # (B, 1)
    high = last_obs[:, VALID_BET_HIGH:VALID_BET_HIGH + 1]                 # (B, 1)
    pot = last_obs[:, POT_SIZE:POT_SIZE + 1]                              # (B, 1)
    mid = 0.5 * (low + high)

    col = lax.broadcasted_iota(jnp.int32, (B, N_BET_BUCKETS), 1)
    # buckets_ref is (1, N_BET_BUCKETS) with the first 3 columns zero; columns
    # 0..2 are overwritten with [low, mid, high] (torch.cat equivalent).
    betsize = pot * buckets_ref[...]
    betsize = jnp.where(col == 0, low, betsize)
    betsize = jnp.where(col == 1, mid, betsize)
    betsize = jnp.where(col == 2, high, betsize)

    bet = jnp.where((low > betsize) | (high < betsize), NULL_VALUE, bet)
    all_null_b = jnp.all(bet == NULL_VALUE, axis=1, keepdims=True)
    bet = jnp.where(all_null_b, 0.0, bet)
    # invalid_actions[:, 2] == 1  <=>  bet/raise action not available
    bet = jnp.where(invalid_actions[:, 2:3], NULL_VALUE, bet)

    action_dist = _log_softmax(action)
    bet_dist = _log_softmax(bet)

    # single lane-dense (B, 128) store; real columns sliced in the wrapper
    pad = jnp.zeros((B, OUT_W - (N_ACTIONS + N_BET_BUCKETS + 1)), jnp.float32)
    out_ref[...] = jnp.concatenate([action_dist, bet_dist, value, pad], axis=1)


def _pad_gate_weight(w, rows_pad, H):
    """(rows, 3H) gate order r,z,n -> (rows_pad, 3*HP), each gate at lane g*128."""
    rows = w.shape[0]
    out = jnp.zeros((rows_pad, 3 * HP), jnp.float32)
    for g in range(3):
        out = out.at[:rows, g * HP:g * HP + H].set(w[:, g * H:(g + 1) * H])
    return out


@functools.partial(jax.jit, static_argnames=())
def evaluator_network_forward(x_btd, starts, params):
    """x_btd: (B, T, OBS) float32; starts: (B,) int32 lengths (1 <= starts <= T).

    Returns (action_log_dist (B, N_ACTIONS), bet_log_dist (B, N_BET_BUCKETS),
             value (B, 1)) — matching EvaluatorNetwork.forward.
    """
    B, T, D = x_btd.shape
    H = MCTS_RNN_HIDDENS
    B_pad = ((B + 7) // 8) * 8                      # f32 sublane multiple

    # pad batch + obs width, go time-major for cheap per-step leading-axis slices
    x_pad = jnp.zeros((B_pad, T, DP), jnp.float32)
    x_pad = x_pad.at[:B, :, :D].set(x_btd.astype(jnp.float32))
    x_tbd = jnp.transpose(x_pad, (1, 0, 2))                      # (T, B_pad, DP)
    starts_pad = jnp.ones((B_pad,), jnp.int32).at[:B].set(starts.astype(jnp.int32))
    starts_b1 = starts_pad.reshape(B_pad, 1)

    # lane-aligned GRU weights (gate order r, z, n, pre-transposed)
    w_ih_p = _pad_gate_weight(params["w_ih"], DP, H)             # (DP, 3*HP)
    w_hh_p = _pad_gate_weight(params["w_hh"], HP, H)             # (HP, 3*HP)
    b_ih_p = _pad_gate_weight(params["b_ih"], 1, H)              # (1,  3*HP)
    b_hh_p = _pad_gate_weight(params["b_hh"], 1, H)              # (1,  3*HP)

    # fused heads: cols [0:4] action, [4:12] bet, [12] value, rest zero
    w_heads = jnp.zeros((HP, OUT_W), jnp.float32)
    w_heads = w_heads.at[:H, 0:N_ACTIONS].set(params["w_a"])
    w_heads = w_heads.at[:H, N_ACTIONS:N_ACTIONS + N_BET_BUCKETS].set(params["w_b"])
    w_heads = w_heads.at[:H, VALUE_COL:VALUE_COL + 1].set(params["w_v"])
    b_heads = jnp.zeros((1, OUT_W), jnp.float32)
    b_heads = b_heads.at[:, 0:N_ACTIONS].set(params["b_a"])
    b_heads = b_heads.at[:, N_ACTIONS:N_ACTIONS + N_BET_BUCKETS].set(params["b_b"])
    b_heads = b_heads.at[:, VALUE_COL:VALUE_COL + 1].set(params["b_v"])

    buckets_full = jnp.concatenate(
        [jnp.zeros((1, 3), jnp.float32),
         jnp.asarray(BET_BUCKETS, jnp.float32)[None, :]], axis=1)  # (1, N_BET_BUCKETS)

    vmem = pl.BlockSpec(memory_space=pltpu.MemorySpace.VMEM)
    out = pl.pallas_call(
        evaluator_kernel,
        out_shape=jax.ShapeDtypeStruct((B_pad, OUT_W), jnp.float32),
        in_specs=[vmem] * 9,
        out_specs=vmem,
        scratch_shapes=[pltpu.VMEM((T, B_pad, 3 * HP), jnp.float32)],
    )(x_tbd, starts_b1, w_ih_p, w_hh_p, b_ih_p, b_hh_p,
      w_heads, b_heads, buckets_full)

    action_dist = out[:B, 0:N_ACTIONS]
    bet_dist = out[:B, N_ACTIONS:N_ACTIONS + N_BET_BUCKETS]
    value = out[:B, VALUE_COL:VALUE_COL + 1]
    return action_dist, bet_dist, value


def reference_forward(x, starts, params):
    """Pure-JAX replica of EvaluatorNetwork.forward (for verification)."""
    B, T, _ = x.shape
    H = MCTS_RNN_HIDDENS
    w_ih, w_hh = params["w_ih"], params["w_hh"]
    b_ih, b_hh = params["b_ih"][0], params["b_hh"][0]
    h = jnp.zeros((B, H), jnp.float32)
    for t in range(T):
        x_t = x[:, t, :]
        gi = x_t @ w_ih + b_ih
        gh = h @ w_hh + b_hh
        r = jax.nn.sigmoid(gi[:, :H] + gh[:, :H])
        z = jax.nn.sigmoid(gi[:, H:2 * H] + gh[:, H:2 * H])
        n = jnp.tanh(gi[:, 2 * H:] + r * gh[:, 2 * H:])
        h_new = (1 - z) * n + z * h
        valid = (t < starts)[:, None].astype(jnp.float32)
        h = valid * h_new + (1 - valid) * h
    last_obs = x[jnp.arange(B), starts - 1, :]
    invalid_actions = last_obs[:, ACTIONS_START:ACTIONS_END + 1] == 0
    low = last_obs[:, VALID_BET_LOW]
    high = last_obs[:, VALID_BET_HIGH]
    pot = last_obs[:, POT_SIZE]
    mid = (low + high) / 2
    action = h @ params["w_a"] + params["b_a"][0]
    bet = h @ params["w_b"] + params["b_b"][0]
    value = h @ params["w_v"] + params["b_v"][0]
    action = jnp.where(invalid_actions, NULL_VALUE, action)
    action = jnp.where(jnp.all(action == NULL_VALUE, axis=1, keepdims=True), 0.0, action)
    betsize = jnp.asarray(BET_BUCKETS, jnp.float32)[None, :] * pot[:, None]
    betsize = jnp.concatenate(
        [low[:, None], mid[:, None], high[:, None], betsize], axis=1)
    bet = jnp.where((low[:, None] > betsize) | (high[:, None] < betsize), NULL_VALUE, bet)
    bet = jnp.where(jnp.all(bet == NULL_VALUE, axis=1, keepdims=True), 0.0, bet)
    bet = jnp.where(invalid_actions[:, 2:3], NULL_VALUE, bet)
    return (jax.nn.log_softmax(action, axis=1),
            jax.nn.log_softmax(bet, axis=1),
            value)


if __name__ == "__main__":
    B, T, H = 2, 8, MCTS_RNN_HIDDENS
    key = jax.random.PRNGKey(0)
    ks = jax.random.split(key, 14)

    # deterministic synthetic parameters (GRU weights stored pre-transposed,
    # i.e. torch weight_ih_l0.T / weight_hh_l0.T, gate order r, z, n)
    params = {
        "w_ih": 0.1 * jax.random.normal(ks[0], (OBS_SHAPE, 3 * H), jnp.float32),
        "w_hh": 0.1 * jax.random.normal(ks[1], (H, 3 * H), jnp.float32),
        "b_ih": 0.1 * jax.random.normal(ks[2], (1, 3 * H), jnp.float32),
        "b_hh": 0.1 * jax.random.normal(ks[3], (1, 3 * H), jnp.float32),
        "w_a": 0.1 * jax.random.normal(ks[4], (H, N_ACTIONS), jnp.float32),
        "b_a": 0.1 * jax.random.normal(ks[5], (1, N_ACTIONS), jnp.float32),
        "w_b": 0.1 * jax.random.normal(ks[6], (H, N_BET_BUCKETS), jnp.float32),
        "b_b": 0.1 * jax.random.normal(ks[7], (1, N_BET_BUCKETS), jnp.float32),
        "w_v": 0.1 * jax.random.normal(ks[12], (H, 1), jnp.float32),
        "b_v": 0.1 * jax.random.normal(ks[13], (1, 1), jnp.float32),
    }

    # deterministic synthetic input with well-formed game-state columns
    x = jax.random.normal(ks[8], (B, T, OBS_SHAPE), jnp.float32)
    bits = (jax.random.uniform(ks[9], (B, T, N_ACTIONS)) > 0.4).astype(jnp.float32)
    x = x.at[:, :, ACTIONS_START:ACTIONS_END + 1].set(bits)
    low = jax.random.uniform(ks[10], (B, T), minval=1.0, maxval=4.0)
    hi = low + jax.random.uniform(ks[11], (B, T), minval=1.0, maxval=8.0)
    pot = jax.random.uniform(ks[11], (B, T), minval=5.0, maxval=20.0)
    x = x.at[:, :, VALID_BET_LOW].set(low)
    x = x.at[:, :, VALID_BET_HIGH].set(hi)
    x = x.at[:, :, POT_SIZE].set(pot)
    starts = jnp.array([5, 8], dtype=jnp.int32)   # sequence lengths per batch row

    action_dist, bet_dist, value = evaluator_network_forward(x, starts, params)
    jax.block_until_ready((action_dist, bet_dist, value))

    ref_action, ref_bet, ref_value = reference_forward(x, starts, params)
    assert np.allclose(np.asarray(action_dist), np.asarray(ref_action),
                       atol=1e-3, rtol=1e-5), "action_dist mismatch"
    assert np.allclose(np.asarray(bet_dist), np.asarray(ref_bet),
                       atol=1e-3, rtol=1e-5), "bet_dist mismatch"
    assert np.allclose(np.asarray(value), np.asarray(ref_value),
                       atol=1e-3, rtol=1e-5), "value mismatch"
    print("KERNEL_OK")
</pallas_src>

<mosaic_0001>
module attributes {stable_mosaic.version = 11 : i64} {
  func.func @evaluator_kernel(%arg0: memref<8x8x128xf32, #tpu.memory_space<vmem>>, %arg1: memref<8x1xi32, #tpu.memory_space<vmem>>, %arg2: memref<128x384xf32, #tpu.memory_space<vmem>>, %arg3: memref<128x384xf32, #tpu.memory_space<vmem>>, %arg4: memref<1x384xf32, #tpu.memory_space<vmem>>, %arg5: memref<1x384xf32, #tpu.memory_space<vmem>>, %arg6: memref<128x128xf32, #tpu.memory_space<vmem>>, %arg7: memref<1x128xf32, #tpu.memory_space<vmem>>, %arg8: memref<1x8xf32, #tpu.memory_space<vmem>>, %arg9: memref<8x128xf32, #tpu.memory_space<vmem>>, %arg10: memref<8x8x384xf32, #tpu.memory_space<vmem>>) attributes {dimension_semantics = [], scalar_prefetch = 0 : i64, scratch_operands = 1 : i64, tpu.core_type = #tpu.core_type<tc>} {
    %c0 = arith.constant 0 : index
    %c0_0 = arith.constant 0 : index
    %0 = vector.load %arg1[%c0, %c0_0] : memref<8x1xi32, #tpu.memory_space<vmem>>, vector<8x1xi32>
    %c0_1 = arith.constant 0 : index
    %c0_2 = arith.constant 0 : index
    %c0_3 = arith.constant 0 : index
    %1 = vector.load %arg0[%c0_1, %c0_2, %c0_3] : memref<8x8x128xf32, #tpu.memory_space<vmem>>, vector<8x8x128xf32>
    %2 = vector.shape_cast %1 : vector<8x8x128xf32> to vector<64x128xf32>
    %c0_4 = arith.constant 0 : index
    %c0_5 = arith.constant 0 : index
    %3 = vector.load %arg2[%c0_4, %c0_5] : memref<128x384xf32, #tpu.memory_space<vmem>>, vector<128x384xf32>
    %cst = arith.constant dense<0.000000e+00> : vector<64x384xf32>
    %4 = tpu.matmul %2, %3, %cst {dimension_numbers = #tpu.dot_dimension_numbers<[1], [0], [0], [1], [0, 0, 1, 1], [], []>} : vector<64x128xf32>, vector<128x384xf32>, vector<64x384xf32> -> vector<64x384xf32>
    %c0_6 = arith.constant 0 : index
    %c0_7 = arith.constant 0 : index
    %5 = vector.load %arg4[%c0_6, %c0_7] : memref<1x384xf32, #tpu.memory_space<vmem>>, vector<1x384xf32>
    %6 = vector.broadcast %5 : vector<1x384xf32> to vector<64x384xf32>
    %7 = arith.addf %4, %6 : vector<64x384xf32>
    %8 = vector.shape_cast %7 : vector<64x384xf32> to vector<8x8x384xf32>
    %c0_8 = arith.constant 0 : index
    %c0_9 = arith.constant 0 : index
    %c0_10 = arith.constant 0 : index
    %9 = vector.load %arg10[%c0_8, %c0_9, %c0_10] : memref<8x8x384xf32, #tpu.memory_space<vmem>>, vector<8x8x384xf32>
    tpu.vector_store %arg10[%c0_8, %c0_9, %c0_10], %8 {strides = array<i32>} : memref<8x8x384xf32, #tpu.memory_space<vmem>>, vector<8x8x384xf32>,
    %cst_11 = arith.constant 0.000000e+00 : f32
    %10 = vector.broadcast %cst_11 : f32 to vector<8x128xf32>
    %c1_i32 = arith.constant 1 : i32
    %11 = vector.broadcast %c1_i32 : i32 to vector<8x1xi32>
    %12 = arith.cmpi eq, %0, %11 : vector<8x1xi32>
    %13 = vector.extract_strided_slice %1 {offsets = [0, 0, 0], sizes = [1, 8, 128], strides = [1, 1, 1]} : vector<8x8x128xf32> to vector<1x8x128xf32>
    %14 = vector.shape_cast %13 : vector<1x8x128xf32> to vector<8x128xf32>
    %15 = vector.shape_cast %12 : vector<8x1xi1> to vector<8x1xi1>
    %16 = vector.broadcast %15 : vector<8x1xi1> to vector<8x128xi1>
    %17 = arith.select %16, %14, %10 : vector<8x128xi1>, vector<8x128xf32>
    %c2_i32 = arith.constant 2 : i32
    %18 = vector.broadcast %c2_i32 : i32 to vector<8x1xi32>
    %19 = arith.cmpi eq, %0, %18 : vector<8x1xi32>
    %20 = vector.extract_strided_slice %1 {offsets = [1, 0, 0], sizes = [1, 8, 128], strides = [1, 1, 1]} : vector<8x8x128xf32> to vector<1x8x128xf32>
    %21 = vector.shape_cast %20 : vector<1x8x128xf32> to vector<8x128xf32>
    %22 = vector.shape_cast %19 : vector<8x1xi1> to vector<8x1xi1>
    %23 = vector.broadcast %22 : vector<8x1xi1> to vector<8x128xi1>
    %24 = arith.select %23, %21, %17 : vector<8x128xi1>, vector<8x128xf32>
    %c3_i32 = arith.constant 3 : i32
    %25 = vector.broadcast %c3_i32 : i32 to vector<8x1xi32>
    %26 = arith.cmpi eq, %0, %25 : vector<8x1xi32>
    %27 = vector.extract_strided_slice %1 {offsets = [2, 0, 0], sizes = [1, 8, 128], strides = [1, 1, 1]} : vector<8x8x128xf32> to vector<1x8x128xf32>
    %28 = vector.shape_cast %27 : vector<1x8x128xf32> to vector<8x128xf32>
    %29 = vector.shape_cast %26 : vector<8x1xi1> to vector<8x1xi1>
    %30 = vector.broadcast %29 : vector<8x1xi1> to vector<8x128xi1>
    %31 = arith.select %30, %28, %24 : vector<8x128xi1>, vector<8x128xf32>
    %c4_i32 = arith.constant 4 : i32
    %32 = vector.broadcast %c4_i32 : i32 to vector<8x1xi32>
    %33 = arith.cmpi eq, %0, %32 : vector<8x1xi32>
    %34 = vector.extract_strided_slice %1 {offsets = [3, 0, 0], sizes = [1, 8, 128], strides = [1, 1, 1]} : vector<8x8x128xf32> to vector<1x8x128xf32>
    %35 = vector.shape_cast %34 : vector<1x8x128xf32> to vector<8x128xf32>
    %36 = vector.shape_cast %33 : vector<8x1xi1> to vector<8x1xi1>
    %37 = vector.broadcast %36 : vector<8x1xi1> to vector<8x128xi1>
    %38 = arith.select %37, %35, %31 : vector<8x128xi1>, vector<8x128xf32>
    %c5_i32 = arith.constant 5 : i32
    %39 = vector.broadcast %c5_i32 : i32 to vector<8x1xi32>
    %40 = arith.cmpi eq, %0, %39 : vector<8x1xi32>
    %41 = vector.extract_strided_slice %1 {offsets = [4, 0, 0], sizes = [1, 8, 128], strides = [1, 1, 1]} : vector<8x8x128xf32> to vector<1x8x128xf32>
    %42 = vector.shape_cast %41 : vector<1x8x128xf32> to vector<8x128xf32>
    %43 = vector.shape_cast %40 : vector<8x1xi1> to vector<8x1xi1>
    %44 = vector.broadcast %43 : vector<8x1xi1> to vector<8x128xi1>
    %45 = arith.select %44, %42, %38 : vector<8x128xi1>, vector<8x128xf32>
    %c6_i32 = arith.constant 6 : i32
    %46 = vector.broadcast %c6_i32 : i32 to vector<8x1xi32>
    %47 = arith.cmpi eq, %0, %46 : vector<8x1xi32>
    %48 = vector.extract_strided_slice %1 {offsets = [5, 0, 0], sizes = [1, 8, 128], strides = [1, 1, 1]} : vector<8x8x128xf32> to vector<1x8x128xf32>
    %49 = vector.shape_cast %48 : vector<1x8x128xf32> to vector<8x128xf32>
    %50 = vector.shape_cast %47 : vector<8x1xi1> to vector<8x1xi1>
    %51 = vector.broadcast %50 : vector<8x1xi1> to vector<8x128xi1>
    %52 = arith.select %51, %49, %45 : vector<8x128xi1>, vector<8x128xf32>
    %c7_i32 = arith.constant 7 : i32
    %53 = vector.broadcast %c7_i32 : i32 to vector<8x1xi32>
    %54 = arith.cmpi eq, %0, %53 : vector<8x1xi32>
    %55 = vector.extract_strided_slice %1 {offsets = [6, 0, 0], sizes = [1, 8, 128], strides = [1, 1, 1]} : vector<8x8x128xf32> to vector<1x8x128xf32>
    %56 = vector.shape_cast %55 : vector<1x8x128xf32> to vector<8x128xf32>
    %57 = vector.shape_cast %54 : vector<8x1xi1> to vector<8x1xi1>
    %58 = vector.broadcast %57 : vector<8x1xi1> to vector<8x128xi1>
    %59 = arith.select %58, %56, %52 : vector<8x128xi1>, vector<8x128xf32>
    %c8_i32 = arith.constant 8 : i32
    %60 = vector.broadcast %c8_i32 : i32 to vector<8x1xi32>
    %61 = arith.cmpi eq, %0, %60 : vector<8x1xi32>
    %62 = vector.extract_strided_slice %1 {offsets = [7, 0, 0], sizes = [1, 8, 128], strides = [1, 1, 1]} : vector<8x8x128xf32> to vector<1x8x128xf32>
    %63 = vector.shape_cast %62 : vector<1x8x128xf32> to vector<8x128xf32>
    %64 = vector.shape_cast %61 : vector<8x1xi1> to vector<8x1xi1>
    %65 = vector.broadcast %64 : vector<8x1xi1> to vector<8x128xi1>
    %66 = arith.select %65, %63, %59 : vector<8x128xi1>, vector<8x128xf32>
    %c0_12 = arith.constant 0 : index
    %c0_13 = arith.constant 0 : index
    %67 = vector.load %arg3[%c0_12, %c0_13] : memref<128x384xf32, #tpu.memory_space<vmem>>, vector<128x384xf32>
    %c0_14 = arith.constant 0 : index
    %c0_15 = arith.constant 0 : index
    %68 = vector.load %arg5[%c0_14, %c0_15] : memref<1x384xf32, #tpu.memory_space<vmem>>, vector<1x384xf32>
    %69 = vector.shape_cast %68 : vector<1x384xf32> to vector<1x384xf32>
    %70 = vector.broadcast %69 : vector<1x384xf32> to vector<8x384xf32>
    %cst_16 = arith.constant 0.000000e+00 : f32
    %71 = vector.broadcast %cst_16 : f32 to vector<8x128xf32>
    %c0_i32 = arith.constant 0 : i32
    %72 = arith.index_cast %c0_i32 : i32 to index
    %c0_17 = arith.constant 0 : index
    %c0_18 = arith.constant 0 : index
    %73 = vector.load %arg10[%72, %c0_17, %c0_18] : memref<8x8x384xf32, #tpu.memory_space<vmem>>, vector<1x8x384xf32>
    %74 = vector.shape_cast %73 : vector<1x8x384xf32> to vector<8x384xf32>
    %cst_19 = arith.constant dense<0.000000e+00> : vector<8x384xf32>
    %75 = tpu.matmul %71, %67, %cst_19 {dimension_numbers = #tpu.dot_dimension_numbers<[1], [0], [0], [1], [0, 0, 1, 1], [], []>} : vector<8x128xf32>, vector<128x384xf32>, vector<8x384xf32> -> vector<8x384xf32>
    %76 = arith.addf %75, %70 : vector<8x384xf32>
    %77 = vector.extract_strided_slice %74 {offsets = [0, 0], sizes = [8, 128], strides = [1, 1]} : vector<8x384xf32> to vector<8x128xf32>
    %78 = vector.extract_strided_slice %76 {offsets = [0, 0], sizes = [8, 128], strides = [1, 1]} : vector<8x384xf32> to vector<8x128xf32>
    %79 = arith.addf %77, %78 : vector<8x128xf32>
    %80 = arith.negf %79 : vector<8x128xf32>
    %81 = math.exp %80 : vector<8x128xf32>
    %cst_20 = arith.constant 1.000000e+00 : f32
    %82 = vector.broadcast %cst_20 : f32 to vector<8x128xf32>
    %83 = arith.addf %82, %81 : vector<8x128xf32>
    %84 = arith.divf %82, %83 : vector<8x128xf32>
    %85 = vector.extract_strided_slice %74 {offsets = [0, 128], sizes = [8, 128], strides = [1, 1]} : vector<8x384xf32> to vector<8x128xf32>
    %86 = vector.extract_strided_slice %76 {offsets = [0, 128], sizes = [8, 128], strides = [1, 1]} : vector<8x384xf32> to vector<8x128xf32>
    %87 = arith.addf %85, %86 : vector<8x128xf32>
    %88 = arith.negf %87 : vector<8x128xf32>
    %89 = math.exp %88 : vector<8x128xf32>
    %cst_21 = arith.constant 1.000000e+00 : f32
    %90 = vector.broadcast %cst_21 : f32 to vector<8x128xf32>
    %91 = arith.addf %90, %89 : vector<8x128xf32>
    %92 = arith.divf %90, %91 : vector<8x128xf32>
    %93 = vector.extract_strided_slice %74 {offsets = [0, 256], sizes = [8, 128], strides = [1, 1]} : vector<8x384xf32> to vector<8x128xf32>
    %94 = vector.extract_strided_slice %76 {offsets = [0, 256], sizes = [8, 128], strides = [1, 1]} : vector<8x384xf32> to vector<8x128xf32>
    %95 = arith.mulf %84, %94 : vector<8x128xf32>
    %96 = arith.addf %93, %95 : vector<8x128xf32>
    %97 = math.tanh %96 : vector<8x128xf32>
    %cst_22 = arith.constant 1.000000e+00 : f32
    %98 = vector.broadcast %cst_22 : f32 to vector<8x128xf32>
    %99 = arith.subf %98, %92 : vector<8x128xf32>
    %100 = arith.mulf %99, %97 : vector<8x128xf32>
    %101 = arith.mulf %92, %71 : vector<8x128xf32>
    %102 = arith.addf %100, %101 : vector<8x128xf32>
    %103 = vector.broadcast %c0_i32 : i32 to vector<8x1xi32>
    %104 = arith.cmpi slt, %103, %0 : vector<8x1xi32>
    %105 = vector.shape_cast %104 : vector<8x1xi1> to vector<8x1xi1>
    %106 = vector.broadcast %105 : vector<8x1xi1> to vector<8x128xi1>
    %107 = arith.select %106, %102, %71 : vector<8x128xi1>, vector<8x128xf32>
    %c1_i32_23 = arith.constant 1 : i32
    %108 = arith.index_cast %c1_i32_23 : i32 to index
    %c0_24 = arith.constant 0 : index
    %c0_25 = arith.constant 0 : index
    %109 = vector.load %arg10[%108, %c0_24, %c0_25] : memref<8x8x384xf32, #tpu.memory_space<vmem>>, vector<1x8x384xf32>
    %110 = vector.shape_cast %109 : vector<1x8x384xf32> to vector<8x384xf32>
    %cst_26 = arith.constant dense<0.000000e+00> : vector<8x384xf32>
    %111 = tpu.matmul %107, %67, %cst_26 {dimension_numbers = #tpu.dot_dimension_numbers<[1], [0], [0], [1], [0, 0, 1, 1], [], []>} : vector<8x128xf32>, vector<128x384xf32>, vector<8x384xf32> -> vector<8x384xf32>
    %112 = arith.addf %111, %70 : vector<8x384xf32>
    %113 = vector.extract_strided_slice %110 {offsets = [0, 0], sizes = [8, 128], strides = [1, 1]} : vector<8x384xf32> to vector<8x128xf32>
    %114 = vector.extract_strided_slice %112 {offsets = [0, 0], sizes = [8, 128], strides = [1, 1]} : vector<8x384xf32> to vector<8x128xf32>
    %115 = arith.addf %113, %114 : vector<8x128xf32>
    %116 = arith.negf %115 : vector<8x128xf32>
    %117 = math.exp %116 : vector<8x128xf32>
    %cst_27 = arith.constant 1.000000e+00 : f32
    %118 = vector.broadcast %cst_27 : f32 to vector<8x128xf32>
    %119 = arith.addf %118, %117 : vector<8x128xf32>
    %120 = arith.divf %118, %119 : vector<8x128xf32>
    %121 = vector.extract_strided_slice %110 {offsets = [0, 128], sizes = [8, 128], strides = [1, 1]} : vector<8x384xf32> to vector<8x128xf32>
    %122 = vector.extract_strided_slice %112 {offsets = [0, 128], sizes = [8, 128], strides = [1, 1]} : vector<8x384xf32> to vector<8x128xf32>
    %123 = arith.addf %121, %122 : vector<8x128xf32>
    %124 = arith.negf %123 : vector<8x128xf32>
    %125 = math.exp %124 : vector<8x128xf32>
    %cst_28 = arith.constant 1.000000e+00 : f32
    %126 = vector.broadcast %cst_28 : f32 to vector<8x128xf32>
    %127 = arith.addf %126, %125 : vector<8x128xf32>
    %128 = arith.divf %126, %127 : vector<8x128xf32>
    %129 = vector.extract_strided_slice %110 {offsets = [0, 256], sizes = [8, 128], strides = [1, 1]} : vector<8x384xf32> to vector<8x128xf32>
    %130 = vector.extract_strided_slice %112 {offsets = [0, 256], sizes = [8, 128], strides = [1, 1]} : vector<8x384xf32> to vector<8x128xf32>
    %131 = arith.mulf %120, %130 : vector<8x128xf32>
    %132 = arith.addf %129, %131 : vector<8x128xf32>
    %133 = math.tanh %132 : vector<8x128xf32>
    %cst_29 = arith.constant 1.000000e+00 : f32
    %134 = vector.broadcast %cst_29 : f32 to vector<8x128xf32>
    %135 = arith.subf %134, %128 : vector<8x128xf32>
    %136 = arith.mulf %135, %133 : vector<8x128xf32>
    %137 = arith.mulf %128, %107 : vector<8x128xf32>
    %138 = arith.addf %136, %137 : vector<8x128xf32>
    %139 = vector.broadcast %c1_i32_23 : i32 to vector<8x1xi32>
    %140 = arith.cmpi slt, %139, %0 : vector<8x1xi32>
    %141 = vector.shape_cast %140 : vector<8x1xi1> to vector<8x1xi1>
    %142 = vector.broadcast %141 : vector<8x1xi1> to vector<8x128xi1>
    %143 = arith.select %142, %138, %107 : vector<8x128xi1>, vector<8x128xf32>
    %c2_i32_30 = arith.constant 2 : i32
    %144 = arith.index_cast %c2_i32_30 : i32 to index
    %c0_31 = arith.constant 0 : index
    %c0_32 = arith.constant 0 : index
    %145 = vector.load %arg10[%144, %c0_31, %c0_32] : memref<8x8x384xf32, #tpu.memory_space<vmem>>, vector<1x8x384xf32>
    %146 = vector.shape_cast %145 : vector<1x8x384xf32> to vector<8x384xf32>
    %cst_33 = arith.constant dense<0.000000e+00> : vector<8x384xf32>
    %147 = tpu.matmul %143, %67, %cst_33 {dimension_numbers = #tpu.dot_dimension_numbers<[1], [0], [0], [1], [0, 0, 1, 1], [], []>} : vector<8x128xf32>, vector<128x384xf32>, vector<8x384xf32> -> vector<8x384xf32>
    %148 = arith.addf %147, %70 : vector<8x384xf32>
    %149 = vector.extract_strided_slice %146 {offsets = [0, 0], sizes = [8, 128], strides = [1, 1]} : vector<8x384xf32> to vector<8x128xf32>
    %150 = vector.extract_strided_slice %148 {offsets = [0, 0], sizes = [8, 128], strides = [1, 1]} : vector<8x384xf32> to vector<8x128xf32>
    %151 = arith.addf %149, %150 : vector<8x128xf32>
    %152 = arith.negf %151 : vector<8x128xf32>
    %153 = math.exp %152 : vector<8x128xf32>
    %cst_34 = arith.constant 1.000000e+00 : f32
    %154 = vector.broadcast %cst_34 : f32 to vector<8x128xf32>
    %155 = arith.addf %154, %153 : vector<8x128xf32>
    %156 = arith.divf %154, %155 : vector<8x128xf32>
    %157 = vector.extract_strided_slice %146 {offsets = [0, 128], sizes = [8, 128], strides = [1, 1]} : vector<8x384xf32> to vector<8x128xf32>
    %158 = vector.extract_strided_slice %148 {offsets = [0, 128], sizes = [8, 128], strides = [1, 1]} : vector<8x384xf32> to vector<8x128xf32>
    %159 = arith.addf %157, %158 : vector<8x128xf32>
    %160 = arith.negf %159 : vector<8x128xf32>
    %161 = math.exp %160 : vector<8x128xf32>
    %cst_35 = arith.constant 1.000000e+00 : f32
    %162 = vector.broadcast %cst_35 : f32 to vector<8x128xf32>
    %163 = arith.addf %162, %161 : vector<8x128xf32>
    %164 = arith.divf %162, %163 : vector<8x128xf32>
    %165 = vector.extract_strided_slice %146 {offsets = [0, 256], sizes = [8, 128], strides = [1, 1]} : vector<8x384xf32> to vector<8x128xf32>
    %166 = vector.extract_strided_slice %148 {offsets = [0, 256], sizes = [8, 128], strides = [1, 1]} : vector<8x384xf32> to vector<8x128xf32>
    %167 = arith.mulf %156, %166 : vector<8x128xf32>
    %168 = arith.addf %165, %167 : vector<8x128xf32>
    %169 = math.tanh %168 : vector<8x128xf32>
    %cst_36 = arith.constant 1.000000e+00 : f32
    %170 = vector.broadcast %cst_36 : f32 to vector<8x128xf32>
    %171 = arith.subf %170, %164 : vector<8x128xf32>
    %172 = arith.mulf %171, %169 : vector<8x128xf32>
    %173 = arith.mulf %164, %143 : vector<8x128xf32>
    %174 = arith.addf %172, %173 : vector<8x128xf32>
    %175 = vector.broadcast %c2_i32_30 : i32 to vector<8x1xi32>
    %176 = arith.cmpi slt, %175, %0 : vector<8x1xi32>
    %177 = vector.shape_cast %176 : vector<8x1xi1> to vector<8x1xi1>
    %178 = vector.broadcast %177 : vector<8x1xi1> to vector<8x128xi1>
    %179 = arith.select %178, %174, %143 : vector<8x128xi1>, vector<8x128xf32>
    %c3_i32_37 = arith.constant 3 : i32
    %180 = arith.index_cast %c3_i32_37 : i32 to index
    %c0_38 = arith.constant 0 : index
    %c0_39 = arith.constant 0 : index
    %181 = vector.load %arg10[%180, %c0_38, %c0_39] : memref<8x8x384xf32, #tpu.memory_space<vmem>>, vector<1x8x384xf32>
    %182 = vector.shape_cast %181 : vector<1x8x384xf32> to vector<8x384xf32>
    %cst_40 = arith.constant dense<0.000000e+00> : vector<8x384xf32>
    %183 = tpu.matmul %179, %67, %cst_40 {dimension_numbers = #tpu.dot_dimension_numbers<[1], [0], [0], [1], [0, 0, 1, 1], [], []>} : vector<8x128xf32>, vector<128x384xf32>, vector<8x384xf32> -> vector<8x384xf32>
    %184 = arith.addf %183, %70 : vector<8x384xf32>
    %185 = vector.extract_strided_slice %182 {offsets = [0, 0], sizes = [8, 128], strides = [1, 1]} : vector<8x384xf32> to vector<8x128xf32>
    %186 = vector.extract_strided_slice %184 {offsets = [0, 0], sizes = [8, 128], strides = [1, 1]} : vector<8x384xf32> to vector<8x128xf32>
    %187 = arith.addf %185, %186 : vector<8x128xf32>
    %188 = arith.negf %187 : vector<8x128xf32>
    %189 = math.exp %188 : vector<8x128xf32>
    %cst_41 = arith.constant 1.000000e+00 : f32
    %190 = vector.broadcast %cst_41 : f32 to vector<8x128xf32>
    %191 = arith.addf %190, %189 : vector<8x128xf32>
    %192 = arith.divf %190, %191 : vector<8x128xf32>
    %193 = vector.extract_strided_slice %182 {offsets = [0, 128], sizes = [8, 128], strides = [1, 1]} : vector<8x384xf32> to vector<8x128xf32>
    %194 = vector.extract_strided_slice %184 {offsets = [0, 128], sizes = [8, 128], strides = [1, 1]} : vector<8x384xf32> to vector<8x128xf32>
    %195 = arith.addf %193, %194 : vector<8x128xf32>
    %196 = arith.negf %195 : vector<8x128xf32>
    %197 = math.exp %196 : vector<8x128xf32>
    %cst_42 = arith.constant 1.000000e+00 : f32
    %198 = vector.broadcast %cst_42 : f32 to vector<8x128xf32>
    %199 = arith.addf %198, %197 : vector<8x128xf32>
    %200 = arith.divf %198, %199 : vector<8x128xf32>
    %201 = vector.extract_strided_slice %182 {offsets = [0, 256], sizes = [8, 128], strides = [1, 1]} : vector<8x384xf32> to vector<8x128xf32>
    %202 = vector.extract_strided_slice %184 {offsets = [0, 256], sizes = [8, 128], strides = [1, 1]} : vector<8x384xf32> to vector<8x128xf32>
    %203 = arith.mulf %192, %202 : vector<8x128xf32>
    %204 = arith.addf %201, %203 : vector<8x128xf32>
    %205 = math.tanh %204 : vector<8x128xf32>
    %cst_43 = arith.constant 1.000000e+00 : f32
    %206 = vector.broadcast %cst_43 : f32 to vector<8x128xf32>
    %207 = arith.subf %206, %200 : vector<8x128xf32>
    %208 = arith.mulf %207, %205 : vector<8x128xf32>
    %209 = arith.mulf %200, %179 : vector<8x128xf32>
    %210 = arith.addf %208, %209 : vector<8x128xf32>
    %211 = vector.broadcast %c3_i32_37 : i32 to vector<8x1xi32>
    %212 = arith.cmpi slt, %211, %0 : vector<8x1xi32>
    %213 = vector.shape_cast %212 : vector<8x1xi1> to vector<8x1xi1>
    %214 = vector.broadcast %213 : vector<8x1xi1> to vector<8x128xi1>
    %215 = arith.select %214, %210, %179 : vector<8x128xi1>, vector<8x128xf32>
    %c4_i32_44 = arith.constant 4 : i32
    %216 = arith.index_cast %c4_i32_44 : i32 to index
    %c0_45 = arith.constant 0 : index
    %c0_46 = arith.constant 0 : index
    %217 = vector.load %arg10[%216, %c0_45, %c0_46] : memref<8x8x384xf32, #tpu.memory_space<vmem>>, vector<1x8x384xf32>
    %218 = vector.shape_cast %217 : vector<1x8x384xf32> to vector<8x384xf32>
    %cst_47 = arith.constant dense<0.000000e+00> : vector<8x384xf32>
    %219 = tpu.matmul %215, %67, %cst_47 {dimension_numbers = #tpu.dot_dimension_numbers<[1], [0], [0], [1], [0, 0, 1, 1], [], []>} : vector<8x128xf32>, vector<128x384xf32>, vector<8x384xf32> -> vector<8x384xf32>
    %220 = arith.addf %219, %70 : vector<8x384xf32>
    %221 = vector.extract_strided_slice %218 {offsets = [0, 0], sizes = [8, 128], strides = [1, 1]} : vector<8x384xf32> to vector<8x128xf32>
    %222 = vector.extract_strided_slice %220 {offsets = [0, 0], sizes = [8, 128], strides = [1, 1]} : vector<8x384xf32> to vector<8x128xf32>
    %223 = arith.addf %221, %222 : vector<8x128xf32>
    %224 = arith.negf %223 : vector<8x128xf32>
    %225 = math.exp %224 : vector<8x128xf32>
    %cst_48 = arith.constant 1.000000e+00 : f32
    %226 = vector.broadcast %cst_48 : f32 to vector<8x128xf32>
    %227 = arith.addf %226, %225 : vector<8x128xf32>
    %228 = arith.divf %226, %227 : vector<8x128xf32>
    %229 = vector.extract_strided_slice %218 {offsets = [0, 128], sizes = [8, 128], strides = [1, 1]} : vector<8x384xf32> to vector<8x128xf32>
    %230 = vector.extract_strided_slice %220 {offsets = [0, 128], sizes = [8, 128], strides = [1, 1]} : vector<8x384xf32> to vector<8x128xf32>
    %231 = arith.addf %229, %230 : vector<8x128xf32>
    %232 = arith.negf %231 : vector<8x128xf32>
    %233 = math.exp %232 : vector<8x128xf32>
    %cst_49 = arith.constant 1.000000e+00 : f32
    %234 = vector.broadcast %cst_49 : f32 to vector<8x128xf32>
    %235 = arith.addf %234, %233 : vector<8x128xf32>
    %236 = arith.divf %234, %235 : vector<8x128xf32>
    %237 = vector.extract_strided_slice %218 {offsets = [0, 256], sizes = [8, 128], strides = [1, 1]} : vector<8x384xf32> to vector<8x128xf32>
    %238 = vector.extract_strided_slice %220 {offsets = [0, 256], sizes = [8, 128], strides = [1, 1]} : vector<8x384xf32> to vector<8x128xf32>
    %239 = arith.mulf %228, %238 : vector<8x128xf32>
    %240 = arith.addf %237, %239 : vector<8x128xf32>
    %241 = math.tanh %240 : vector<8x128xf32>
    %cst_50 = arith.constant 1.000000e+00 : f32
    %242 = vector.broadcast %cst_50 : f32 to vector<8x128xf32>
    %243 = arith.subf %242, %236 : vector<8x128xf32>
    %244 = arith.mulf %243, %241 : vector<8x128xf32>
    %245 = arith.mulf %236, %215 : vector<8x128xf32>
    %246 = arith.addf %244, %245 : vector<8x128xf32>
    %247 = vector.broadcast %c4_i32_44 : i32 to vector<8x1xi32>
    %248 = arith.cmpi slt, %247, %0 : vector<8x1xi32>
    %249 = vector.shape_cast %248 : vector<8x1xi1> to vector<8x1xi1>
    %250 = vector.broadcast %249 : vector<8x1xi1> to vector<8x128xi1>
    %251 = arith.select %250, %246, %215 : vector<8x128xi1>, vector<8x128xf32>
    %c5_i32_51 = arith.constant 5 : i32
    %252 = arith.index_cast %c5_i32_51 : i32 to index
    %c0_52 = arith.constant 0 : index
    %c0_53 = arith.constant 0 : index
    %253 = vector.load %arg10[%252, %c0_52, %c0_53] : memref<8x8x384xf32, #tpu.memory_space<vmem>>, vector<1x8x384xf32>
    %254 = vector.shape_cast %253 : vector<1x8x384xf32> to vector<8x384xf32>
    %cst_54 = arith.constant dense<0.000000e+00> : vector<8x384xf32>
    %255 = tpu.matmul %251, %67, %cst_54 {dimension_numbers = #tpu.dot_dimension_numbers<[1], [0], [0], [1], [0, 0, 1, 1], [], []>} : vector<8x128xf32>, vector<128x384xf32>, vector<8x384xf32> -> vector<8x384xf32>
    %256 = arith.addf %255, %70 : vector<8x384xf32>
    %257 = vector.extract_strided_slice %254 {offsets = [0, 0], sizes = [8, 128], strides = [1, 1]} : vector<8x384xf32> to vector<8x128xf32>
    %258 = vector.extract_strided_slice %256 {offsets = [0, 0], sizes = [8, 128], strides = [1, 1]} : vector<8x384xf32> to vector<8x128xf32>
    %259 = arith.addf %257, %258 : vector<8x128xf32>
    %260 = arith.negf %259 : vector<8x128xf32>
    %261 = math.exp %260 : vector<8x128xf32>
    %cst_55 = arith.constant 1.000000e+00 : f32
    %262 = vector.broadcast %cst_55 : f32 to vector<8x128xf32>
    %263 = arith.addf %262, %261 : vector<8x128xf32>
    %264 = arith.divf %262, %263 : vector<8x128xf32>
    %265 = vector.extract_strided_slice %254 {offsets = [0, 128], sizes = [8, 128], strides = [1, 1]} : vector<8x384xf32> to vector<8x128xf32>
    %266 = vector.extract_strided_slice %256 {offsets = [0, 128], sizes = [8, 128], strides = [1, 1]} : vector<8x384xf32> to vector<8x128xf32>
    %267 = arith.addf %265, %266 : vector<8x128xf32>
    %268 = arith.negf %267 : vector<8x128xf32>
    %269 = math.exp %268 : vector<8x128xf32>
    %cst_56 = arith.constant 1.000000e+00 : f32
    %270 = vector.broadcast %cst_56 : f32 to vector<8x128xf32>
    %271 = arith.addf %270, %269 : vector<8x128xf32>
    %272 = arith.divf %270, %271 : vector<8x128xf32>
    %273 = vector.extract_strided_slice %254 {offsets = [0, 256], sizes = [8, 128], strides = [1, 1]} : vector<8x384xf32> to vector<8x128xf32>
    %274 = vector.extract_strided_slice %256 {offsets = [0, 256], sizes = [8, 128], strides = [1, 1]} : vector<8x384xf32> to vector<8x128xf32>
    %275 = arith.mulf %264, %274 : vector<8x128xf32>
    %276 = arith.addf %273, %275 : vector<8x128xf32>
    %277 = math.tanh %276 : vector<8x128xf32>
    %cst_57 = arith.constant 1.000000e+00 : f32
    %278 = vector.broadcast %cst_57 : f32 to vector<8x128xf32>
    %279 = arith.subf %278, %272 : vector<8x128xf32>
    %280 = arith.mulf %279, %277 : vector<8x128xf32>
    %281 = arith.mulf %272, %251 : vector<8x128xf32>
    %282 = arith.addf %280, %281 : vector<8x128xf32>
    %283 = vector.broadcast %c5_i32_51 : i32 to vector<8x1xi32>
    %284 = arith.cmpi slt, %283, %0 : vector<8x1xi32>
    %285 = vector.shape_cast %284 : vector<8x1xi1> to vector<8x1xi1>
    %286 = vector.broadcast %285 : vector<8x1xi1> to vector<8x128xi1>
    %287 = arith.select %286, %282, %251 : vector<8x128xi1>, vector<8x128xf32>
    %c6_i32_58 = arith.constant 6 : i32
    %288 = arith.index_cast %c6_i32_58 : i32 to index
    %c0_59 = arith.constant 0 : index
    %c0_60 = arith.constant 0 : index
    %289 = vector.load %arg10[%288, %c0_59, %c0_60] : memref<8x8x384xf32, #tpu.memory_space<vmem>>, vector<1x8x384xf32>
    %290 = vector.shape_cast %289 : vector<1x8x384xf32> to vector<8x384xf32>
    %cst_61 = arith.constant dense<0.000000e+00> : vector<8x384xf32>
    %291 = tpu.matmul %287, %67, %cst_61 {dimension_numbers = #tpu.dot_dimension_numbers<[1], [0], [0], [1], [0, 0, 1, 1], [], []>} : vector<8x128xf32>, vector<128x384xf32>, vector<8x384xf32> -> vector<8x384xf32>
    %292 = arith.addf %291, %70 : vector<8x384xf32>
    %293 = vector.extract_strided_slice %290 {offsets = [0, 0], sizes = [8, 128], strides = [1, 1]} : vector<8x384xf32> to vector<8x128xf32>
    %294 = vector.extract_strided_slice %292 {offsets = [0, 0], sizes = [8, 128], strides = [1, 1]} : vector<8x384xf32> to vector<8x128xf32>
    %295 = arith.addf %293, %294 : vector<8x128xf32>
    %296 = arith.negf %295 : vector<8x128xf32>
    %297 = math.exp %296 : vector<8x128xf32>
    %cst_62 = arith.constant 1.000000e+00 : f32
    %298 = vector.broadcast %cst_62 : f32 to vector<8x128xf32>
    %299 = arith.addf %298, %297 : vector<8x128xf32>
    %300 = arith.divf %298, %299 : vector<8x128xf32>
    %301 = vector.extract_strided_slice %290 {offsets = [0, 128], sizes = [8, 128], strides = [1, 1]} : vector<8x384xf32> to vector<8x128xf32>
    %302 = vector.extract_strided_slice %292 {offsets = [0, 128], sizes = [8, 128], strides = [1, 1]} : vector<8x384xf32> to vector<8x128xf32>
    %303 = arith.addf %301, %302 : vector<8x128xf32>
    %304 = arith.negf %303 : vector<8x128xf32>
    %305 = math.exp %304 : vector<8x128xf32>
    %cst_63 = arith.constant 1.000000e+00 : f32
    %306 = vector.broadcast %cst_63 : f32 to vector<8x128xf32>
    %307 = arith.addf %306, %305 : vector<8x128xf32>
    %308 = arith.divf %306, %307 : vector<8x128xf32>
    %309 = vector.extract_strided_slice %290 {offsets = [0, 256], sizes = [8, 128], strides = [1, 1]} : vector<8x384xf32> to vector<8x128xf32>
    %310 = vector.extract_strided_slice %292 {offsets = [0, 256], sizes = [8, 128], strides = [1, 1]} : vector<8x384xf32> to vector<8x128xf32>
    %311 = arith.mulf %300, %310 : vector<8x128xf32>
    %312 = arith.addf %309, %311 : vector<8x128xf32>
    %313 = math.tanh %312 : vector<8x128xf32>
    %cst_64 = arith.constant 1.000000e+00 : f32
    %314 = vector.broadcast %cst_64 : f32 to vector<8x128xf32>
    %315 = arith.subf %314, %308 : vector<8x128xf32>
    %316 = arith.mulf %315, %313 : vector<8x128xf32>
    %317 = arith.mulf %308, %287 : vector<8x128xf32>
    %318 = arith.addf %316, %317 : vector<8x128xf32>
    %319 = vector.broadcast %c6_i32_58 : i32 to vector<8x1xi32>
    %320 = arith.cmpi slt, %319, %0 : vector<8x1xi32>
    %321 = vector.shape_cast %320 : vector<8x1xi1> to vector<8x1xi1>
    %322 = vector.broadcast %321 : vector<8x1xi1> to vector<8x128xi1>
    %323 = arith.select %322, %318, %287 : vector<8x128xi1>, vector<8x128xf32>
    %c7_i32_65 = arith.constant 7 : i32
    %324 = arith.index_cast %c7_i32_65 : i32 to index
    %c0_66 = arith.constant 0 : index
    %c0_67 = arith.constant 0 : index
    %325 = vector.load %arg10[%324, %c0_66, %c0_67] : memref<8x8x384xf32, #tpu.memory_space<vmem>>, vector<1x8x384xf32>
    %326 = vector.shape_cast %325 : vector<1x8x384xf32> to vector<8x384xf32>
    %cst_68 = arith.constant dense<0.000000e+00> : vector<8x384xf32>
    %327 = tpu.matmul %323, %67, %cst_68 {dimension_numbers = #tpu.dot_dimension_numbers<[1], [0], [0], [1], [0, 0, 1, 1], [], []>} : vector<8x128xf32>, vector<128x384xf32>, vector<8x384xf32> -> vector<8x384xf32>
    %328 = arith.addf %327, %70 : vector<8x384xf32>
    %329 = vector.extract_strided_slice %326 {offsets = [0, 0], sizes = [8, 128], strides = [1, 1]} : vector<8x384xf32> to vector<8x128xf32>
    %330 = vector.extract_strided_slice %328 {offsets = [0, 0], sizes = [8, 128], strides = [1, 1]} : vector<8x384xf32> to vector<8x128xf32>
    %331 = arith.addf %329, %330 : vector<8x128xf32>
    %332 = arith.negf %331 : vector<8x128xf32>
    %333 = math.exp %332 : vector<8x128xf32>
    %cst_69 = arith.constant 1.000000e+00 : f32
    %334 = vector.broadcast %cst_69 : f32 to vector<8x128xf32>
    %335 = arith.addf %334, %333 : vector<8x128xf32>
    %336 = arith.divf %334, %335 : vector<8x128xf32>
    %337 = vector.extract_strided_slice %326 {offsets = [0, 128], sizes = [8, 128], strides = [1, 1]} : vector<8x384xf32> to vector<8x128xf32>
    %338 = vector.extract_strided_slice %328 {offsets = [0, 128], sizes = [8, 128], strides = [1, 1]} : vector<8x384xf32> to vector<8x128xf32>
    %339 = arith.addf %337, %338 : vector<8x128xf32>
    %340 = arith.negf %339 : vector<8x128xf32>
    %341 = math.exp %340 : vector<8x128xf32>
    %cst_70 = arith.constant 1.000000e+00 : f32
    %342 = vector.broadcast %cst_70 : f32 to vector<8x128xf32>
    %343 = arith.addf %342, %341 : vector<8x128xf32>
    %344 = arith.divf %342, %343 : vector<8x128xf32>
    %345 = vector.extract_strided_slice %326 {offsets = [0, 256], sizes = [8, 128], strides = [1, 1]} : vector<8x384xf32> to vector<8x128xf32>
    %346 = vector.extract_strided_slice %328 {offsets = [0, 256], sizes = [8, 128], strides = [1, 1]} : vector<8x384xf32> to vector<8x128xf32>
    %347 = arith.mulf %336, %346 : vector<8x128xf32>
    %348 = arith.addf %345, %347 : vector<8x128xf32>
    %349 = math.tanh %348 : vector<8x128xf32>
    %cst_71 = arith.constant 1.000000e+00 : f32
    %350 = vector.broadcast %cst_71 : f32 to vector<8x128xf32>
    %351 = arith.subf %350, %344 : vector<8x128xf32>
    %352 = arith.mulf %351, %349 : vector<8x128xf32>
    %353 = arith.mulf %344, %323 : vector<8x128xf32>
    %354 = arith.addf %352, %353 : vector<8x128xf32>
    %355 = vector.broadcast %c7_i32_65 : i32 to vector<8x1xi32>
    %356 = arith.cmpi slt, %355, %0 : vector<8x1xi32>
    %357 = vector.shape_cast %356 : vector<8x1xi1> to vector<8x1xi1>
    %358 = vector.broadcast %357 : vector<8x1xi1> to vector<8x128xi1>
    %359 = arith.select %358, %354, %323 : vector<8x128xi1>, vector<8x128xf32>
    %c8_i32_72 = arith.constant 8 : i32
    %c0_73 = arith.constant 0 : index
    %c0_74 = arith.constant 0 : index
    %360 = vector.load %arg6[%c0_73, %c0_74] : memref<128x128xf32, #tpu.memory_space<vmem>>, vector<128x128xf32>
    %cst_75 = arith.constant dense<0.000000e+00> : vector<8x128xf32>
    %361 = tpu.matmul %359, %360, %cst_75 {dimension_numbers = #tpu.dot_dimension_numbers<[1], [0], [0], [1], [0, 0, 1, 1], [], []>} : vector<8x128xf32>, vector<128x128xf32>, vector<8x128xf32> -> vector<8x128xf32>
    %c0_76 = arith.constant 0 : index
    %c0_77 = arith.constant 0 : index
    %362 = vector.load %arg7[%c0_76, %c0_77] : memref<1x128xf32, #tpu.memory_space<vmem>>, vector<1x128xf32>
    %363 = vector.broadcast %362 : vector<1x128xf32> to vector<8x128xf32>
    %364 = arith.addf %361, %363 : vector<8x128xf32>
    %365 = vector.extract_strided_slice %364 {offsets = [0, 0], sizes = [8, 4], strides = [1, 1]} : vector<8x128xf32> to vector<8x4xf32>
    %366 = vector.extract_strided_slice %364 {offsets = [0, 4], sizes = [8, 8], strides = [1, 1]} : vector<8x128xf32> to vector<8x8xf32>
    %367 = vector.extract_strided_slice %364 {offsets = [0, 12], sizes = [8, 1], strides = [1, 1]} : vector<8x128xf32> to vector<8x1xf32>
    %368 = vector.extract_strided_slice %66 {offsets = [0, 10], sizes = [8, 4], strides = [1, 1]} : vector<8x128xf32> to vector<8x4xf32>
    %cst_78 = arith.constant 0.000000e+00 : f32
    %369 = vector.broadcast %cst_78 : f32 to vector<8x4xf32>
    %370 = arith.cmpf oeq, %368, %369 : vector<8x4xf32>
    %cst_79 = arith.constant -1.000000e+05 : f32
    %371 = vector.broadcast %cst_79 : f32 to vector<8x4xf32>
    %372 = arith.select %370, %371, %365 : vector<8x4xi1>, vector<8x4xf32>
    %cst_80 = arith.constant -1.000000e+05 : f32
    %373 = vector.broadcast %cst_80 : f32 to vector<8x4xf32>
    %374 = arith.cmpf oeq, %372, %373 : vector<8x4xf32>
    %cst_81 = arith.constant 1.000000e+00 : f32
    %cst_82 = arith.constant 0.000000e+00 : f32
    %375 = vector.broadcast %cst_81 : f32 to vector<8x4xf32>
    %376 = vector.broadcast %cst_82 : f32 to vector<8x4xf32>
    %377 = arith.select %374, %375, %376 : vector<8x4xi1>, vector<8x4xf32>
    %cst_83 = arith.constant dense<0x7F800000> : vector<8xf32>
    %378 = vector.multi_reduction <minimumf>, %377, %cst_83 [1] : vector<8x4xf32> to vector<8xf32>
    %cst_84 = arith.constant 0.000000e+00 : f32
    %379 = vector.broadcast %cst_84 : f32 to vector<8xf32>
    %380 = arith.cmpf ogt, %378, %379 : vector<8xf32>
    %381 = vector.shape_cast %380 : vector<8xi1> to vector<8x1xi1>
    %cst_85 = arith.constant 0.000000e+00 : f32
    %382 = vector.shape_cast %381 : vector<8x1xi1> to vector<8x1xi1>
    %383 = vector.broadcast %382 : vector<8x1xi1> to vector<8x4xi1>
    %384 = vector.broadcast %cst_85 : f32 to vector<8x4xf32>
    %385 = arith.select %383, %384, %372 : vector<8x4xi1>, vector<8x4xf32>
    %386 = vector.extract_strided_slice %66 {offsets = [0, 14], sizes = [8, 1], strides = [1, 1]} : vector<8x128xf32> to vector<8x1xf32>
    %387 = vector.extract_strided_slice %66 {offsets = [0, 15], sizes = [8, 1], strides = [1, 1]} : vector<8x128xf32> to vector<8x1xf32>
    %388 = vector.extract_strided_slice %66 {offsets = [0, 16], sizes = [8, 1], strides = [1, 1]} : vector<8x128xf32> to vector<8x1xf32>
    %389 = arith.addf %386, %387 : vector<8x1xf32>
    %cst_86 = arith.constant 5.000000e-01 : f32
    %390 = vector.broadcast %cst_86 : f32 to vector<8x1xf32>
    %391 = arith.mulf %390, %389 : vector<8x1xf32>
    %392 = tpu.iota {dimensions = array<i32: 1>} : vector<8x8xi32>
    %c0_87 = arith.constant 0 : index
    %c0_88 = arith.constant 0 : index
    %393 = vector.load %arg8[%c0_87, %c0_88] : memref<1x8xf32, #tpu.memory_space<vmem>>, vector<1x8xf32>
    %394 = vector.broadcast %388 : vector<8x1xf32> to vector<8x8xf32>
    %395 = vector.broadcast %393 : vector<1x8xf32> to vector<8x8xf32>
    %396 = arith.mulf %394, %395 : vector<8x8xf32>
    %c0_i32_89 = arith.constant 0 : i32
    %397 = vector.broadcast %c0_i32_89 : i32 to vector<8x8xi32>
    %398 = arith.cmpi eq, %392, %397 : vector<8x8xi32>
    %399 = vector.shape_cast %386 : vector<8x1xf32> to vector<8x1xf32>
    %400 = vector.broadcast %399 : vector<8x1xf32> to vector<8x8xf32>
    %401 = arith.select %398, %400, %396 : vector<8x8xi1>, vector<8x8xf32>
    %c1_i32_90 = arith.constant 1 : i32
    %402 = vector.broadcast %c1_i32_90 : i32 to vector<8x8xi32>
    %403 = arith.cmpi eq, %392, %402 : vector<8x8xi32>
    %404 = vector.shape_cast %391 : vector<8x1xf32> to vector<8x1xf32>
    %405 = vector.broadcast %404 : vector<8x1xf32> to vector<8x8xf32>
    %406 = arith.select %403, %405, %401 : vector<8x8xi1>, vector<8x8xf32>
    %c2_i32_91 = arith.constant 2 : i32
    %407 = vector.broadcast %c2_i32_91 : i32 to vector<8x8xi32>
    %408 = arith.cmpi eq, %392, %407 : vector<8x8xi32>
    %409 = vector.shape_cast %387 : vector<8x1xf32> to vector<8x1xf32>
    %410 = vector.broadcast %409 : vector<8x1xf32> to vector<8x8xf32>
    %411 = arith.select %408, %410, %406 : vector<8x8xi1>, vector<8x8xf32>
    %412 = vector.broadcast %386 : vector<8x1xf32> to vector<8x8xf32>
    %413 = arith.cmpf ogt, %412, %411 : vector<8x8xf32>
    %414 = vector.broadcast %387 : vector<8x1xf32> to vector<8x8xf32>
    %415 = arith.cmpf olt, %414, %411 : vector<8x8xf32>
    %416 = arith.ori %413, %415 : vector<8x8xi1>
    %cst_92 = arith.constant -1.000000e+05 : f32
    %417 = vector.broadcast %cst_92 : f32 to vector<8x8xf32>
    %418 = arith.select %416, %417, %366 : vector<8x8xi1>, vector<8x8xf32>
    %cst_93 = arith.constant -1.000000e+05 : f32
    %419 = vector.broadcast %cst_93 : f32 to vector<8x8xf32>
    %420 = arith.cmpf oeq, %418, %419 : vector<8x8xf32>
    %cst_94 = arith.constant 1.000000e+00 : f32
    %cst_95 = arith.constant 0.000000e+00 : f32
    %421 = vector.broadcast %cst_94 : f32 to vector<8x8xf32>
    %422 = vector.broadcast %cst_95 : f32 to vector<8x8xf32>
    %423 = arith.select %420, %421, %422 : vector<8x8xi1>, vector<8x8xf32>
    %cst_96 = arith.constant dense<0x7F800000> : vector<8xf32>
    %424 = vector.multi_reduction <minimumf>, %423, %cst_96 [1] : vector<8x8xf32> to vector<8xf32>
    %cst_97 = arith.constant 0.000000e+00 : f32
    %425 = vector.broadcast %cst_97 : f32 to vector<8xf32>
    %426 = arith.cmpf ogt, %424, %425 : vector<8xf32>
    %427 = vector.shape_cast %426 : vector<8xi1> to vector<8x1xi1>
    %cst_98 = arith.constant 0.000000e+00 : f32
    %428 = vector.shape_cast %427 : vector<8x1xi1> to vector<8x1xi1>
    %429 = vector.broadcast %428 : vector<8x1xi1> to vector<8x8xi1>
    %430 = vector.broadcast %cst_98 : f32 to vector<8x8xf32>
    %431 = arith.select %429, %430, %418 : vector<8x8xi1>, vector<8x8xf32>
    %432 = vector.extract_strided_slice %370 {offsets = [0, 2], sizes = [8, 1], strides = [1, 1]} : vector<8x4xi1> to vector<8x1xi1>
    %cst_99 = arith.constant -1.000000e+05 : f32
    %433 = vector.shape_cast %432 : vector<8x1xi1> to vector<8x1xi1>
    %434 = vector.broadcast %433 : vector<8x1xi1> to vector<8x8xi1>
    %435 = vector.broadcast %cst_99 : f32 to vector<8x8xf32>
    %436 = arith.select %434, %435, %431 : vector<8x8xi1>, vector<8x8xf32>
    %cst_100 = arith.constant dense<0xFF800000> : vector<8xf32>
    %437 = vector.multi_reduction <maximumf>, %385, %cst_100 [1] : vector<8x4xf32> to vector<8xf32>
    %438 = vector.shape_cast %437 : vector<8xf32> to vector<8x1xf32>
    %439 = vector.broadcast %438 : vector<8x1xf32> to vector<8x4xf32>
    %440 = arith.subf %385, %439 : vector<8x4xf32>
    %441 = math.exp %440 : vector<8x4xf32>
    %cst_101 = arith.constant dense<0.000000e+00> : vector<8xf32>
    %442 = vector.multi_reduction <add>, %441, %cst_101 [1] : vector<8x4xf32> to vector<8xf32>
    %443 = vector.shape_cast %442 : vector<8xf32> to vector<8x1xf32>
    %444 = math.log %443 : vector<8x1xf32>
    %445 = vector.broadcast %444 : vector<8x1xf32> to vector<8x4xf32>
    %446 = arith.subf %440, %445 : vector<8x4xf32>
    %cst_102 = arith.constant dense<0xFF800000> : vector<8xf32>
    %447 = vector.multi_reduction <maximumf>, %436, %cst_102 [1] : vector<8x8xf32> to vector<8xf32>
    %448 = vector.shape_cast %447 : vector<8xf32> to vector<8x1xf32>
    %449 = vector.broadcast %448 : vector<8x1xf32> to vector<8x8xf32>
    %450 = arith.subf %436, %449 : vector<8x8xf32>
    %451 = math.exp %450 : vector<8x8xf32>
    %cst_103 = arith.constant dense<0.000000e+00> : vector<8xf32>
    %452 = vector.multi_reduction <add>, %451, %cst_103 [1] : vector<8x8xf32> to vector<8xf32>
    %453 = vector.shape_cast %452 : vector<8xf32> to vector<8x1xf32>
    %454 = math.log %453 : vector<8x1xf32>
    %455 = vector.broadcast %454 : vector<8x1xf32> to vector<8x8xf32>
    %456 = arith.subf %450, %455 : vector<8x8xf32>
    %cst_104 = arith.constant 0.000000e+00 : f32
    %457 = vector.broadcast %cst_104 : f32 to vector<8x115xf32>
    %458 = tpu.concatenate %446, %456, %367, %457 in 1 : vector<8x4xf32>, vector<8x8xf32>, vector<8x1xf32>, vector<8x115xf32> -> vector<8x128xf32>
    %c0_105 = arith.constant 0 : index
    %c0_106 = arith.constant 0 : index
    %459 = vector.load %arg9[%c0_105, %c0_106] : memref<8x128xf32, #tpu.memory_space<vmem>>, vector<8x128xf32>
    tpu.vector_store %arg9[%c0_105, %c0_106], %458 {strides = array<i32>} : memref<8x128xf32, #tpu.memory_space<vmem>>, vector<8x128xf32>,
    return
  }
}

</mosaic_0001>

<llo_original>
// kernel: evaluator_network_forward.1
$region0: #{evaluator_network_forward.1}
  #allocation0 [shape = 'u32[]', space=smem, size = 0x4, offset = 0x4, fixed_abs, tag = 'smem constant byte address 0x4 - core index']
  #allocation1 [shape = 'u32[144,128]{1,0:T(1,128)}', space=vmem, size = 0x12000, scoped, tag = 'internal scratch']
  #allocation2 [shape = 'f32[8,8,384]{2,1,0:T(8,128)}', space=vmem, size = 0x18000, scoped, tag = 'scratch operand']
  %s0 = inlined_call_operand.vmem [shape: f32[8,8,128], index: 0, kind: input, shape index: {}]
  %s1 = inlined_call_operand.vmem [shape: s32[8,1], index: 1, kind: input, shape index: {}]
  %s2 = inlined_call_operand.vmem [shape: f32[128,384], index: 2, kind: input, shape index: {}]
  %s3 = inlined_call_operand.vmem [shape: f32[128,384], index: 3, kind: input, shape index: {}]
  %s4 = inlined_call_operand.vmem [shape: f32[1,384], index: 4, kind: input, shape index: {}]
  %s5 = inlined_call_operand.vmem [shape: f32[1,384], index: 5, kind: input, shape index: {}]
  %s6 = inlined_call_operand.vmem [shape: f32[128,128], index: 6, kind: input, shape index: {}]
  %s7 = inlined_call_operand.vmem [shape: f32[1,128], index: 7, kind: input, shape index: {}]
  %s8 = inlined_call_operand.vmem [shape: f32[1,8], index: 8, kind: input, shape index: {}]
  %s9 = inlined_call_operand.vmem [shape: f32[8,128], index: 9, kind: output, shape index: {}]
  %s10 = sld [smem:[#allocation0]]
  $region46: #{evaluator_network_forward.1} parent=0
    _
  %s12 = ssub.s32 1, %s10
  %s13 = scalar_select 0, %s12, %s10
  // Predicated region
  $region2: #{evaluator_network_forward.1} parent=0 // pred_check
    _
  $region3: #{evaluator_network_forward.1} parent=0 // pred_check_branch
    %15 = sbr.rel (0) target = $region5
  $region4: #{evaluator_network_forward.1} parent=0 // pred_region
    _
  $region5: #{evaluator_network_forward.1} parent=0 // pred_fallthru
    _
  // Predicated region
  $region6: #{evaluator_network_forward.1} parent=0 // pred_check
    _
  $region7: #{evaluator_network_forward.1} parent=0 // pred_check_branch
    %17 = sbr.rel (0) target = $region9
  $region8: #{evaluator_network_forward.1} parent=0 // pred_region
    _
  $region9: #{evaluator_network_forward.1} parent=0 // pred_fallthru
    _
  // Predicated region
  $region10: #{evaluator_network_forward.1} parent=0 // pred_check
    _
  $region11: #{evaluator_network_forward.1} parent=0 // pred_check_branch
    %19 = sbr.rel (0) target = $region13
  $region12: #{evaluator_network_forward.1} parent=0 // pred_region
    _
  $region13: #{evaluator_network_forward.1} parent=0 // pred_fallthru
    _
  // Predicated region
  $region14: #{evaluator_network_forward.1} parent=0 // pred_check
    _
  $region15: #{evaluator_network_forward.1} parent=0 // pred_check_branch
    %21 = sbr.rel (0) target = $region17
  $region16: #{evaluator_network_forward.1} parent=0 // pred_region
    _
  $region17: #{evaluator_network_forward.1} parent=0 // pred_fallthru
    _
  // Predicated region
  $region18: #{evaluator_network_forward.1} parent=0 // pred_check
    _
  $region19: #{evaluator_network_forward.1} parent=0 // pred_check_branch
    %23 = sbr.rel (0) target = $region21
  $region20: #{evaluator_network_forward.1} parent=0 // pred_region
    _
  $region21: #{evaluator_network_forward.1} parent=0 // pred_fallthru
    _
  // Predicated region
  $region22: #{evaluator_network_forward.1} parent=0 // pred_check
    _
  $region23: #{evaluator_network_forward.1} parent=0 // pred_check_branch
    %25 = sbr.rel (0) target = $region25
  $region24: #{evaluator_network_forward.1} parent=0 // pred_region
    _
  $region25: #{evaluator_network_forward.1} parent=0 // pred_fallthru
    _
  // Predicated region
  $region26: #{evaluator_network_forward.1} parent=0 // pred_check
    _
  $region27: #{evaluator_network_forward.1} parent=0 // pred_check_branch
    %27 = sbr.rel (0) target = $region29
  $region28: #{evaluator_network_forward.1} parent=0 // pred_region
    _
  $region29: #{evaluator_network_forward.1} parent=0 // pred_fallthru
    _
  // Predicated region
  $region30: #{evaluator_network_forward.1} parent=0 // pred_check
    _
  $region31: #{evaluator_network_forward.1} parent=0 // pred_check_branch
    %29 = sbr.rel (0) target = $region33
  $region32: #{evaluator_network_forward.1} parent=0 // pred_region
    _
  $region33: #{evaluator_network_forward.1} parent=0 // pred_fallthru
    _
  // Predicated region
  $region34: #{evaluator_network_forward.1} parent=0 // pred_check
    _
  $region35: #{evaluator_network_forward.1} parent=0 // pred_check_branch
    %31 = sbr.rel (0) target = $region37
  $region36: #{evaluator_network_forward.1} parent=0 // pred_region
    _
  $region37: #{evaluator_network_forward.1} parent=0 // pred_fallthru
    _
  %v32 = vld [vmem:[%s1] sm:$0xff]
  %v33 = vld [vmem:[%s0] sm:$0xff]
  %v34 = vld [vmem:[%s0 + $0x8] sm:$0xff]
  %v35 = vld [vmem:[%s0 + $0x10] sm:$0xff]
  %v36 = vld [vmem:[%s0 + $0x18] sm:$0xff]
  %v37 = vld [vmem:[%s0 + $0x20] sm:$0xff]
  %v38 = vld [vmem:[%s0 + $0x28] sm:$0xff]
  %v39 = vld [vmem:[%s0 + $0x30] sm:$0xff]
  %v40 = vld [vmem:[%s0 + $0x38] sm:$0xff]
  %v41 = vld [vmem:[%s2] sm:$0xff]
  %v42 = vld [vmem:[%s2 + $0x8] sm:$0xff]
  %v43 = vld [vmem:[%s2 + $0x10] sm:$0xff]
  %v44 = vld [vmem:[%s2 + $0x18] sm:$0xff]
  %v45 = vld [vmem:[%s2 + $0x20] sm:$0xff]
  %v46 = vld [vmem:[%s2 + $0x28] sm:$0xff]
  %v47 = vld [vmem:[%s2 + $0x30] sm:$0xff]
  %v48 = vld [vmem:[%s2 + $0x38] sm:$0xff]
  %v49 = vld [vmem:[%s2 + $0x40] sm:$0xff]
  %v50 = vld [vmem:[%s2 + $0x48] sm:$0xff]
  %v51 = vld [vmem:[%s2 + $0x50] sm:$0xff]
  %v52 = vld [vmem:[%s2 + $0x58] sm:$0xff]
  %v53 = vld [vmem:[%s2 + $0x60] sm:$0xff]
  %v54 = vld [vmem:[%s2 + $0x68] sm:$0xff]
  %v55 = vld [vmem:[%s2 + $0x70] sm:$0xff]
  %v56 = vld [vmem:[%s2 + $0x78] sm:$0xff]
  %v57 = vld [vmem:[%s2 + $0x80] sm:$0xff]
  %v58 = vld [vmem:[%s2 + $0x88] sm:$0xff]
  %v59 = vld [vmem:[%s2 + $0x90] sm:$0xff]
  %v60 = vld [vmem:[%s2 + $0x98] sm:$0xff]
  %v61 = vld [vmem:[%s2 + $0xa0] sm:$0xff]
  %v62 = vld [vmem:[%s2 + $0xa8] sm:$0xff]
  %v63 = vld [vmem:[%s2 + $0xb0] sm:$0xff]
  %v64 = vld [vmem:[%s2 + $0xb8] sm:$0xff]
  %v65 = vld [vmem:[%s2 + $0xc0] sm:$0xff]
  %v66 = vld [vmem:[%s2 + $0xc8] sm:$0xff]
  %v67 = vld [vmem:[%s2 + $0xd0] sm:$0xff]
  %v68 = vld [vmem:[%s2 + $0xd8] sm:$0xff]
  %v69 = vld [vmem:[%s2 + $0xe0] sm:$0xff]
  %v70 = vld [vmem:[%s2 + $0xe8] sm:$0xff]
  %v71 = vld [vmem:[%s2 + $0xf0] sm:$0xff]
  %v72 = vld [vmem:[%s2 + $0xf8] sm:$0xff]
  %v73 = vld [vmem:[%s2 + $0x100] sm:$0xff]
  %v74 = vld [vmem:[%s2 + $0x108] sm:$0xff]
  %v75 = vld [vmem:[%s2 + $0x110] sm:$0xff]
  %v76 = vld [vmem:[%s2 + $0x118] sm:$0xff]
  %v77 = vld [vmem:[%s2 + $0x120] sm:$0xff]
  %v78 = vld [vmem:[%s2 + $0x128] sm:$0xff]
  %v79 = vld [vmem:[%s2 + $0x130] sm:$0xff]
  %v80 = vld [vmem:[%s2 + $0x138] sm:$0xff]
  %v81 = vld [vmem:[%s2 + $0x140] sm:$0xff]
  %v82 = vld [vmem:[%s2 + $0x148] sm:$0xff]
  %v83 = vld [vmem:[%s2 + $0x150] sm:$0xff]
  %v84 = vld [vmem:[%s2 + $0x158] sm:$0xff]
  %v85 = vld [vmem:[%s2 + $0x160] sm:$0xff]
  %v86 = vld [vmem:[%s2 + $0x168] sm:$0xff]
  %v87 = vld [vmem:[%s2 + $0x170] sm:$0xff]
  %v88 = vld [vmem:[%s2 + $0x178] sm:$0xff]
  %v89 = vld [vmem:[%s4] sm:$0x7]
  %v91 = vlaneseq
  %v92 = vshrl.u32 %v91, 7
  %v93 = vsub.s32 0, %v92
  %v94 = vrot.slane %v89, %v93
  %v95 = vlaneseq
  %v96 = vshrl.u32 %v95, 7
  %v97 = vsub.s32 1, %v96
  %v98 = vrot.slane %v89, %v97
  %v99 = vlaneseq
  %v100 = vshrl.u32 %v99, 7
  %v101 = vsub.s32 2, %v100
  %v102 = vrot.slane %v89, %v101
  %106 = vmatprep.subr.mxu0 %v42
  %107 = vmatpush1.msra.mxu0 %v41
  %108 = vmatprep.subr.mxu0 %v45
  %109 = vmatpush1.msra.mxu0 %v44
  %110 = vmatprep.subr.mxu0 %v48
  %111 = vmatpush1.msra.mxu0 %v47
  %112 = vmatprep.subr.mxu0 %v51
  %113 = vmatpush1.msra.mxu0 %v50
  %114 = vmatprep.subr.mxu0 %v54
  %115 = vmatpush1.msra.mxu0 %v53
  %116 = vmatprep.subr.mxu0 %v57
  %117 = vmatpush1.msra.mxu0 %v56
  %118 = vmatprep.subr.mxu0 %v60
  %119 = vmatpush1.msra.mxu0 %v59
  %120 = vmatprep.subr.mxu0 %v63
  %121 = vmatpush1.msra.mxu0 %v62
  %122 = vmatprep.subr.mxu0 %v66
  %123 = vmatpush1.msra.mxu0 %v65
  %124 = vmatprep.subr.mxu0 %v69
  %125 = vmatpush1.msra.mxu0 %v68
  %126 = vmatprep.subr.mxu0 %v72
  %127 = vmatpush1.msra.mxu0 %v71
  %128 = vmatprep.subr.mxu0 %v75
  %129 = vmatpush1.msra.mxu0 %v74
  %130 = vmatprep.subr.mxu0 %v78
  %131 = vmatpush1.msra.mxu0 %v77
  %132 = vmatprep.subr.mxu0 %v81
  %133 = vmatpush1.msra.mxu0 %v80
  %134 = vmatprep.subr.mxu0 %v84
  %135 = vmatpush1.msra.mxu0 %v83
  %136 = vmatprep.subr.mxu0 %v87
  %137 = vmatpush1.msra.mxu0 %v86
  %138 = vmatprep.subr.mxu0 0.0
  %139 = vmatpush1.msra.mxu0 0.0
  %140 = vmatprep.subr.mxu0 0.0
  %141 = vmatpush1.msra.mxu0 0.0
  %142 = vmatprep.subr.mxu0 0.0
  %143 = vmatpush1.msra.mxu0 0.0
  %144 = vmatprep.subr.mxu0 0.0
  %145 = vmatpush1.msra.mxu0 0.0
  %146 = vmatprep.subr.mxu0 0.0
  %147 = vmatpush1.msra.mxu0 0.0
  %148 = vmatprep.subr.mxu0 0.0
  %149 = vmatpush1.msra.mxu0 0.0
  %150 = vmatprep.subr.mxu0 0.0
  %151 = vmatpush1.msra.mxu0 0.0
  %152 = vmatprep.subr.mxu0 0.0
  %153 = vmatpush1.msra.mxu0 0.0
  %154 = vmatprep.subr.mxu0 0.0
  %155 = vmatpush1.msra.mxu0 0.0
  %156 = vmatprep.subr.mxu0 0.0
  %157 = vmatpush1.msra.mxu0 0.0
  %158 = vmatprep.subr.mxu0 0.0
  %159 = vmatpush1.msra.mxu0 0.0
  %160 = vmatprep.subr.mxu0 0.0
  %161 = vmatpush1.msra.mxu0 0.0
  %162 = vmatprep.subr.mxu0 0.0
  %163 = vmatpush1.msra.mxu0 0.0
  %164 = vmatprep.subr.mxu0 0.0
  %165 = vmatpush1.msra.mxu0 0.0
  %166 = vmatprep.subr.mxu0 0.0
  %167 = vmatpush1.msra.mxu0 0.0
  %168 = vmatprep.subr.mxu0 0.0
  %169 = vmatpush1.msra.mxu0 0.0
  %170 = vmatprep.mubr.f32.mxu0 0.0
  %171 = vmatmul.mubr.f32.gmra.mrb[0].mxu0 %v33
  %v172 = vpop.f32.mrb[0].mxu0
  %v173 = vadd.f32 %v94, %v172
  %v174 = vpop.f32.mrb[0].mxu0
  %v175 = vadd.f32 %v98, %v174
  %176 = vmatprep.mubr.f32.mxu0 0.0
  %177 = vmatmul.mubr.f32.gmra.mrb[0].mxu0 %v34
  %v178 = vpop.f32.mrb[0].mxu0
  %v179 = vadd.f32 %v94, %v178
  %v180 = vpop.f32.mrb[0].mxu0
  %v181 = vadd.f32 %v98, %v180
  %182 = vmatprep.mubr.f32.mxu0 0.0
  %183 = vmatmul.mubr.f32.gmra.mrb[0].mxu0 %v35
  %v184 = vpop.f32.mrb[0].mxu0
  %v185 = vadd.f32 %v94, %v184
  %v186 = vpop.f32.mrb[0].mxu0
  %v187 = vadd.f32 %v98, %v186
  %188 = vmatprep.mubr.f32.mxu0 0.0
  %189 = vmatmul.mubr.f32.gmra.mrb[0].mxu0 %v36
  %v190 = vpop.f32.mrb[0].mxu0
  %v191 = vadd.f32 %v94, %v190
  %v192 = vpop.f32.mrb[0].mxu0
  %v193 = vadd.f32 %v98, %v192
  %194 = vmatprep.mubr.f32.mxu0 0.0
  %195 = vmatmul.mubr.f32.gmra.mrb[0].mxu0 %v37
  %v196 = vpop.f32.mrb[0].mxu0
  %v197 = vadd.f32 %v94, %v196
  %v198 = vpop.f32.mrb[0].mxu0
  %v199 = vadd.f32 %v98, %v198
  %200 = vmatprep.mubr.f32.mxu0 0.0
  %201 = vmatmul.mubr.f32.gmra.mrb[0].mxu0 %v38
  %v202 = vpop.f32.mrb[0].mxu0
  %v203 = vadd.f32 %v94, %v202
  %v204 = vpop.f32.mrb[0].mxu0
  %v205 = vadd.f32 %v98, %v204
  %206 = vmatprep.mubr.f32.mxu0 0.0
  %207 = vmatmul.mubr.f32.gmra.mrb[0].mxu0 %v39
  %v208 = vpop.f32.mrb[0].mxu0
  %v209 = vadd.f32 %v94, %v208
  %v210 = vpop.f32.mrb[0].mxu0
  %v211 = vadd.f32 %v98, %v210
  %212 = vmatprep.mubr.f32.mxu0 0.0
  %213 = vmatmul.mubr.f32.gmra.mrb[0].mxu0 %v40
  %v214 = vpop.f32.mrb[0].mxu0
  %v215 = vadd.f32 %v94, %v214
  %v216 = vpop.f32.mrb[0].mxu0
  %v217 = vadd.f32 %v98, %v216
  %218 = vdwg.mxu0
  %219 = vmatprep.subr.mxu0 0.0
  %220 = vmatpush1.msra.mxu0 %v43
  %221 = vmatprep.subr.mxu0 0.0
  %222 = vmatpush1.msra.mxu0 %v46
  %223 = vmatprep.subr.mxu0 0.0
  %224 = vmatpush1.msra.mxu0 %v49
  %225 = vmatprep.subr.mxu0 0.0
  %226 = vmatpush1.msra.mxu0 %v52
  %227 = vmatprep.subr.mxu0 0.0
  %228 = vmatpush1.msra.mxu0 %v55
  %229 = vmatprep.subr.mxu0 0.0
  %230 = vmatpush1.msra.mxu0 %v58
  %231 = vmatprep.subr.mxu0 0.0
  %232 = vmatpush1.msra.mxu0 %v61
  %233 = vmatprep.subr.mxu0 0.0
  %234 = vmatpush1.msra.mxu0 %v64
  %235 = vmatprep.subr.mxu0 0.0
  %236 = vmatpush1.msra.mxu0 %v67
  %237 = vmatprep.subr.mxu0 0.0
  %238 = vmatpush1.msra.mxu0 %v70
  %239 = vmatprep.subr.mxu0 0.0
  %240 = vmatpush1.msra.mxu0 %v73
  %241 = vmatprep.subr.mxu0 0.0
  %242 = vmatpush1.msra.mxu0 %v76
  %243 = vmatprep.subr.mxu0 0.0
  %244 = vmatpush1.msra.mxu0 %v79
  %245 = vmatprep.subr.mxu0 0.0
  %246 = vmatpush1.msra.mxu0 %v82
  %247 = vmatprep.subr.mxu0 0.0
  %248 = vmatpush1.msra.mxu0 %v85
  %249 = vmatprep.subr.mxu0 0.0
  %250 = vmatpush1.msra.mxu0 %v88
  %251 = vmatprep.subr.mxu0 0.0
  %252 = vmatpush1.msra.mxu0 0.0
  %253 = vmatprep.subr.mxu0 0.0
  %254 = vmatpush1.msra.mxu0 0.0
  %255 = vmatprep.subr.mxu0 0.0
  %256 = vmatpush1.msra.mxu0 0.0
  %257 = vmatprep.subr.mxu0 0.0
  %258 = vmatpush1.msra.mxu0 0.0
  %259 = vmatprep.subr.mxu0 0.0
  %260 = vmatpush1.msra.mxu0 0.0
  %261 = vmatprep.subr.mxu0 0.0
  %262 = vmatpush1.msra.mxu0 0.0
  %263 = vmatprep.subr.mxu0 0.0
  %264 = vmatpush1.msra.mxu0 0.0
  %265 = vmatprep.subr.mxu0 0.0
  %266 = vmatpush1.msra.mxu0 0.0
  %267 = vmatprep.subr.mxu0 0.0
  %268 = vmatpush1.msra.mxu0 0.0
  %269 = vmatprep.subr.mxu0 0.0
  %270 = vmatpush1.msra.mxu0 0.0
  %271 = vmatprep.subr.mxu0 0.0
  %272 = vmatpush1.msra.mxu0 0.0
  %273 = vmatprep.subr.mxu0 0.0
  %274 = vmatpush1.msra.mxu0 0.0
  %275 = vmatprep.subr.mxu0 0.0
  %276 = vmatpush1.msra.mxu0 0.0
  %277 = vmatprep.subr.mxu0 0.0
  %278 = vmatpush1.msra.mxu0 0.0
  %279 = vmatprep.subr.mxu0 0.0
  %280 = vmatpush1.msra.mxu0 0.0
  %281 = vmatprep.subr.mxu0 0.0
  %282 = vmatpush1.msra.mxu0 0.0
  %283 = vmatprep.mubr.f32.mxu0 0.0
  %284 = vmatmul.mubr.f32.gmra.mrb[0].mxu0 %v33
  %v285 = vpop.f32.mrb[0].mxu0
  %v286 = vadd.f32 %v102, %v285
  %v287 = vpop.f32.mrb[0].mxu0
  %288 = vmatprep.mubr.f32.mxu0 0.0
  %289 = vmatmul.mubr.f32.gmra.mrb[0].mxu0 %v34
  %v290 = vpop.f32.mrb[0].mxu0
  %v291 = vadd.f32 %v102, %v290
  %v292 = vpop.f32.mrb[0].mxu0
  %293 = vmatprep.mubr.f32.mxu0 0.0
  %294 = vmatmul.mubr.f32.gmra.mrb[0].mxu0 %v35
  %v295 = vpop.f32.mrb[0].mxu0
  %v296 = vadd.f32 %v102, %v295
  %v297 = vpop.f32.mrb[0].mxu0
  %298 = vmatprep.mubr.f32.mxu0 0.0
  %299 = vmatmul.mubr.f32.gmra.mrb[0].mxu0 %v36
  %v300 = vpop.f32.mrb[0].mxu0
  %v301 = vadd.f32 %v102, %v300
  %v302 = vpop.f32.mrb[0].mxu0
  %303 = vmatprep.mubr.f32.mxu0 0.0
  %304 = vmatmul.mubr.f32.gmra.mrb[0].mxu0 %v37
  %v305 = vpop.f32.mrb[0].mxu0
  %v306 = vadd.f32 %v102, %v305
  %v307 = vpop.f32.mrb[0].mxu0
  %308 = vmatprep.mubr.f32.mxu0 0.0
  %309 = vmatmul.mubr.f32.gmra.mrb[0].mxu0 %v38
  %v310 = vpop.f32.mrb[0].mxu0
  %v311 = vadd.f32 %v102, %v310
  %v312 = vpop.f32.mrb[0].mxu0
  %313 = vmatprep.mubr.f32.mxu0 0.0
  %314 = vmatmul.mubr.f32.gmra.mrb[0].mxu0 %v39
  %v315 = vpop.f32.mrb[0].mxu0
  %v316 = vadd.f32 %v102, %v315
  %v317 = vpop.f32.mrb[0].mxu0
  %318 = vmatprep.mubr.f32.mxu0 0.0
  %319 = vmatmul.mubr.f32.gmra.mrb[0].mxu0 %v40
  %v320 = vpop.f32.mrb[0].mxu0
  %v321 = vadd.f32 %v102, %v320
  %v322 = vpop.f32.mrb[0].mxu0
  %323 = vdwg.mxu0
  %324 = vst [vmem:[#allocation2] sm:$0xff] %v173
  %325 = vst [vmem:[#allocation2 + $0x8] sm:$0xff] %v175
  %326 = vst [vmem:[#allocation2 + $0x10] sm:$0xff] %v286
  %327 = vst [vmem:[#allocation2 + $0x18] sm:$0xff] %v179
  %328 = vst [vmem:[#allocation2 + $0x20] sm:$0xff] %v181
  %329 = vst [vmem:[#allocation2 + $0x28] sm:$0xff] %v291
  %330 = vst [vmem:[#allocation2 + $0x30] sm:$0xff] %v185
  %331 = vst [vmem:[#allocation2 + $0x38] sm:$0xff] %v187
  %332 = vst [vmem:[#allocation2 + $0x40] sm:$0xff] %v296
  %333 = vst [vmem:[#allocation2 + $0x48] sm:$0xff] %v191
  %334 = vst [vmem:[#allocation2 + $0x50] sm:$0xff] %v193
  %335 = vst [vmem:[#allocation2 + $0x58] sm:$0xff] %v301
  %336 = vst [vmem:[#allocation2 + $0x60] sm:$0xff] %v197
  %337 = vst [vmem:[#allocation2 + $0x68] sm:$0xff] %v199
  %338 = vst [vmem:[#allocation2 + $0x70] sm:$0xff] %v306
  %339 = vst [vmem:[#allocation2 + $0x78] sm:$0xff] %v203
  %340 = vst [vmem:[#allocation2 + $0x80] sm:$0xff] %v205
  %341 = vst [vmem:[#allocation2 + $0x88] sm:$0xff] %v311
  %342 = vst [vmem:[#allocation2 + $0x90] sm:$0xff] %v209
  %343 = vst [vmem:[#allocation2 + $0x98] sm:$0xff] %v211
  %344 = vst [vmem:[#allocation2 + $0xa0] sm:$0xff] %v316
  %345 = vst [vmem:[#allocation2 + $0xa8] sm:$0xff] %v215
  %346 = vst [vmem:[#allocation2 + $0xb0] sm:$0xff] %v217
  %347 = vst [vmem:[#allocation2 + $0xb8] sm:$0xff] %v321
  %vm348 = vcmp.eq.s32.totalorder %v32, 1
  %v349 = vsel %vm348, 1, 0
  %350 = vset.pattern.permute.xlu0 0
  %351 = vperm.xlu0 %350, %v349
  %v352 = vpop.permute.xlu0 %351
  %vm353 = vcmp.eq.s32.totalorder %v352, 1
  %v354 = vsel %vm353, %v33, 0.0
  %vm355 = vcmp.eq.s32.totalorder %v32, 2
  %v356 = vsel %vm355, 1, 0
  %357 = vset.pattern.permute.xlu0 0
  %358 = vperm.xlu0 %357, %v356
  %v359 = vpop.permute.xlu0 %358
  %vm360 = vcmp.eq.s32.totalorder %v359, 1
  %v361 = vsel %vm360, %v34, %v354
  %vm362 = vcmp.eq.s32.totalorder %v32, 3
  %v363 = vsel %vm362, 1, 0
  %364 = vset.pattern.permute.xlu0 0
  %365 = vperm.xlu0 %364, %v363
  %v366 = vpop.permute.xlu0 %365
  %vm367 = vcmp.eq.s32.totalorder %v366, 1
  %v368 = vsel %vm367, %v35, %v361
  %vm369 = vcmp.eq.s32.totalorder %v32, 4
  %v370 = vsel %vm369, 1, 0
  %371 = vset.pattern.permute.xlu0 0
  %372 = vperm.xlu0 %371, %v370
  %v373 = vpop.permute.xlu0 %372
  %vm374 = vcmp.eq.s32.totalorder %v373, 1
  %v375 = vsel %vm374, %v36, %v368
  %vm376 = vcmp.eq.s32.totalorder %v32, 5
  %v377 = vsel %vm376, 1, 0
  %378 = vset.pattern.permute.xlu0 0
  %379 = vperm.xlu0 %378, %v377
  %v380 = vpop.permute.xlu0 %379
  %vm381 = vcmp.eq.s32.totalorder %v380, 1
  %v382 = vsel %vm381, %v37, %v375
  %vm383 = vcmp.eq.s32.totalorder %v32, 6
  %v384 = vsel %vm383, 1, 0
  %385 = vset.pattern.permute.xlu0 0
  %386 = vperm.xlu0 %385, %v384
  %v387 = vpop.permute.xlu0 %386
  %vm388 = vcmp.eq.s32.totalorder %v387, 1
  %v389 = vsel %vm388, %v38, %v382
  %vm390 = vcmp.eq.s32.totalorder %v32, 7
  %v391 = vsel %vm390, 1, 0
  %392 = vset.pattern.permute.xlu0 0
  %393 = vperm.xlu0 %392, %v391
  %v394 = vpop.permute.xlu0 %393
  %vm395 = vcmp.eq.s32.totalorder %v394, 1
  %v396 = vsel %vm395, %v39, %v389
  %vm397 = vcmp.eq.s32.totalorder %v32, 8
  %v398 = vsel %vm397, 1, 0
  %399 = vset.pattern.permute.xlu0 0
  %400 = vperm.xlu0 %399, %v398
  %v401 = vpop.permute.xlu0 %400
  %vm402 = vcmp.eq.s32.totalorder %v401, 1
  %v403 = vsel %vm402, %v40, %v396
  %v404 = vld [vmem:[%s3] sm:$0xff]
  %v405 = vld [vmem:[%s3 + $0x8] sm:$0xff]
  %v406 = vld [vmem:[%s3 + $0x10] sm:$0xff]
  %v407 = vld [vmem:[%s3 + $0x18] sm:$0xff]
  %v408 = vld [vmem:[%s3 + $0x20] sm:$0xff]
  %v409 = vld [vmem:[%s3 + $0x28] sm:$0xff]
  %v410 = vld [vmem:[%s3 + $0x30] sm:$0xff]
  %v411 = vld [vmem:[%s3 + $0x38] sm:$0xff]
  %v412 = vld [vmem:[%s3 + $0x40] sm:$0xff]
  %v413 = vld [vmem:[%s3 + $0x48] sm:$0xff]
  %v414 = vld [vmem:[%s3 + $0x50] sm:$0xff]
  %v415 = vld [vmem:[%s3 + $0x58] sm:$0xff]
  %v416 = vld [vmem:[%s3 + $0x60] sm:$0xff]
  %v417 = vld [vmem:[%s3 + $0x68] sm:$0xff]
  %v418 = vld [vmem:[%s3 + $0x70] sm:$0xff]
  %v419 = vld [vmem:[%s3 + $0x78] sm:$0xff]
  %v420 = vld [vmem:[%s3 + $0x80] sm:$0xff]
  %v421 = vld [vmem:[%s3 + $0x88] sm:$0xff]
  %v422 = vld [vmem:[%s3 + $0x90] sm:$0xff]
  %v423 = vld [vmem:[%s3 + $0x98] sm:$0xff]
  %v424 = vld [vmem:[%s3 + $0xa0] sm:$0xff]
  %v425 = vld [vmem:[%s3 + $0xa8] sm:$0xff]
  %v426 = vld [vmem:[%s3 + $0xb0] sm:$0xff]
  %v427 = vld [vmem:[%s3 + $0xb8] sm:$0xff]
  %v428 = vld [vmem:[%s3 + $0xc0] sm:$0xff]
  %v429 = vld [vmem:[%s3 + $0xc8] sm:$0xff]
  %v430 = vld [vmem:[%s3 + $0xd0] sm:$0xff]
  %v431 = vld [vmem:[%s3 + $0xd8] sm:$0xff]
  %v432 = vld [vmem:[%s3 + $0xe0] sm:$0xff]
  %v433 = vld [vmem:[%s3 + $0xe8] sm:$0xff]
  %v434 = vld [vmem:[%s3 + $0xf0] sm:$0xff]
  %v435 = vld [vmem:[%s3 + $0xf8] sm:$0xff]
  %v436 = vld [vmem:[%s3 + $0x100] sm:$0xff]
  %v437 = vld [vmem:[%s3 + $0x108] sm:$0xff]
  %v438 = vld [vmem:[%s3 + $0x110] sm:$0xff]
  %v439 = vld [vmem:[%s3 + $0x118] sm:$0xff]
  %v440 = vld [vmem:[%s3 + $0x120] sm:$0xff]
  %v441 = vld [vmem:[%s3 + $0x128] sm:$0xff]
  %v442 = vld [vmem:[%s3 + $0x130] sm:$0xff]
  %v443 = vld [vmem:[%s3 + $0x138] sm:$0xff]
  %v444 = vld [vmem:[%s3 + $0x140] sm:$0xff]
  %v445 = vld [vmem:[%s3 + $0x148] sm:$0xff]
  %v446 = vld [vmem:[%s3 + $0x150] sm:$0xff]
  %v447 = vld [vmem:[%s3 + $0x158] sm:$0xff]
  %v448 = vld [vmem:[%s3 + $0x160] sm:$0xff]
  %v449 = vld [vmem:[%s3 + $0x168] sm:$0xff]
  %v450 = vld [vmem:[%s3 + $0x170] sm:$0xff]
  %v451 = vld [vmem:[%s3 + $0x178] sm:$0xff]
  %v452 = vld [vmem:[%s5] sm:$0x7]
  %v454 = vlaneseq
  %v455 = vshrl.u32 %v454, 7
  %v456 = vsub.s32 0, %v455
  %v457 = vrot.slane %v452, %v456
  %v458 = vlaneseq
  %v459 = vshrl.u32 %v458, 7
  %v460 = vsub.s32 1, %v459
  %v461 = vrot.slane %v452, %v460
  %v462 = vlaneseq
  %v463 = vshrl.u32 %v462, 7
  %v464 = vsub.s32 2, %v463
  %v465 = vrot.slane %v452, %v464
  %v469 = vld [vmem:[#allocation2] sm:$0xff]
  %v470 = vld [vmem:[#allocation2 + $0x8] sm:$0xff]
  %v471 = vld [vmem:[#allocation2 + $0x10] sm:$0xff]
  %472 = vmatprep.subr.mxu0 %v405
  %473 = vmatpush1.msra.mxu0 %v404
  %474 = vmatprep.subr.mxu0 %v408
  %475 = vmatpush1.msra.mxu0 %v407
  %476 = vmatprep.subr.mxu0 %v411
  %477 = vmatpush1.msra.mxu0 %v410
  %478 = vmatprep.subr.mxu0 %v414
  %479 = vmatpush1.msra.mxu0 %v413
  %480 = vmatprep.subr.mxu0 %v417
  %481 = vmatpush1.msra.mxu0 %v416
  %482 = vmatprep.subr.mxu0 %v420
  %483 = vmatpush1.msra.mxu0 %v419
  %484 = vmatprep.subr.mxu0 %v423
  %485 = vmatpush1.msra.mxu0 %v422
  %486 = vmatprep.subr.mxu0 %v426
  %487 = vmatpush1.msra.mxu0 %v425
  %488 = vmatprep.subr.mxu0 %v429
  %489 = vmatpush1.msra.mxu0 %v428
  %490 = vmatprep.subr.mxu0 %v432
  %491 = vmatpush1.msra.mxu0 %v431
  %492 = vmatprep.subr.mxu0 %v435
  %493 = vmatpush1.msra.mxu0 %v434
  %494 = vmatprep.subr.mxu0 %v438
  %495 = vmatpush1.msra.mxu0 %v437
  %496 = vmatprep.subr.mxu0 %v441
  %497 = vmatpush1.msra.mxu0 %v440
  %498 = vmatprep.subr.mxu0 %v444
  %499 = vmatpush1.msra.mxu0 %v443
  %500 = vmatprep.subr.mxu0 %v447
  %501 = vmatpush1.msra.mxu0 %v446
  %502 = vmatprep.subr.mxu0 %v450
  %503 = vmatpush1.msra.mxu0 %v449
  %504 = vmatprep.subr.mxu0 0.0
  %505 = vmatpush1.msra.mxu0 0.0
  %506 = vmatprep.subr.mxu0 0.0
  %507 = vmatpush1.msra.mxu0 0.0
  %508 = vmatprep.subr.mxu0 0.0
  %509 = vmatpush1.msra.mxu0 0.0
  %510 = vmatprep.subr.mxu0 0.0
  %511 = vmatpush1.msra.mxu0 0.0
  %512 = vmatprep.subr.mxu0 0.0
  %513 = vmatpush1.msra.mxu0 0.0
  %514 = vmatprep.subr.mxu0 0.0
  %515 = vmatpush1.msra.mxu0 0.0
  %516 = vmatprep.subr.mxu0 0.0
  %517 = vmatpush1.msra.mxu0 0.0
  %518 = vmatprep.subr.mxu0 0.0
  %519 = vmatpush1.msra.mxu0 0.0
  %520 = vmatprep.subr.mxu0 0.0
  %521 = vmatpush1.msra.mxu0 0.0
  %522 = vmatprep.subr.mxu0 0.0
  %523 = vmatpush1.msra.mxu0 0.0
  %524 = vmatprep.subr.mxu0 0.0
  %525 = vmatpush1.msra.mxu0 0.0
  %526 = vmatprep.subr.mxu0 0.0
  %527 = vmatpush1.msra.mxu0 0.0
  %528 = vmatprep.subr.mxu0 0.0
  %529 = vmatpush1.msra.mxu0 0.0
  %530 = vmatprep.subr.mxu0 0.0
  %531 = vmatpush1.msra.mxu0 0.0
  %532 = vmatprep.subr.mxu0 0.0
  %533 = vmatpush1.msra.mxu0 0.0
  %534 = vmatprep.subr.mxu0 0.0
  %535 = vmatpush1.msra.mxu0 0.0
  %536 = vmatprep.mubr.f32.mxu0 0.0
  %537 = vmatmul.mubr.f32.gmra.mrb[0].mxu0 0.0
  %v538 = vpop.f32.mrb[0].mxu0
  %v539 = vadd.f32 %v457, %v538
  %v540 = vpop.f32.mrb[0].mxu0
  %v541 = vadd.f32 %v461, %v540
  %542 = vdwg.mxu0
  %543 = vmatprep.subr.mxu0 0.0
  %544 = vmatpush1.msra.mxu0 %v406
  %545 = vmatprep.subr.mxu0 0.0
  %546 = vmatpush1.msra.mxu0 %v409
  %547 = vmatprep.subr.mxu0 0.0
  %548 = vmatpush1.msra.mxu0 %v412
  %549 = vmatprep.subr.mxu0 0.0
  %550 = vmatpush1.msra.mxu0 %v415
  %551 = vmatprep.subr.mxu0 0.0
  %552 = vmatpush1.msra.mxu0 %v418
  %553 = vmatprep.subr.mxu0 0.0
  %554 = vmatpush1.msra.mxu0 %v421
  %555 = vmatprep.subr.mxu0 0.0
  %556 = vmatpush1.msra.mxu0 %v424
  %557 = vmatprep.subr.mxu0 0.0
  %558 = vmatpush1.msra.mxu0 %v427
  %559 = vmatprep.subr.mxu0 0.0
  %560 = vmatpush1.msra.mxu0 %v430
  %561 = vmatprep.subr.mxu0 0.0
  %562 = vmatpush1.msra.mxu0 %v433
  %563 = vmatprep.subr.mxu0 0.0
  %564 = vmatpush1.msra.mxu0 %v436
  %565 = vmatprep.subr.mxu0 0.0
  %566 = vmatpush1.msra.mxu0 %v439
  %567 = vmatprep.subr.mxu0 0.0
  %568 = vmatpush1.msra.mxu0 %v442
  %569 = vmatprep.subr.mxu0 0.0
  %570 = vmatpush1.msra.mxu0 %v445
  %571 = vmatprep.subr.mxu0 0.0
  %572 = vmatpush1.msra.mxu0 %v448
  %573 = vmatprep.subr.mxu0 0.0
  %574 = vmatpush1.msra.mxu0 %v451
  %575 = vmatprep.subr.mxu0 0.0
  %576 = vmatpush1.msra.mxu0 0.0
  %577 = vmatprep.subr.mxu0 0.0
  %578 = vmatpush1.msra.mxu0 0.0
  %579 = vmatprep.subr.mxu0 0.0
  %580 = vmatpush1.msra.mxu0 0.0
  %581 = vmatprep.subr.mxu0 0.0
  %582 = vmatpush1.msra.mxu0 0.0
  %583 = vmatprep.subr.mxu0 0.0
  %584 = vmatpush1.msra.mxu0 0.0
  %585 = vmatprep.subr.mxu0 0.0
  %586 = vmatpush1.msra.mxu0 0.0
  %587 = vmatprep.subr.mxu0 0.0
  %588 = vmatpush1.msra.mxu0 0.0
  %589 = vmatprep.subr.mxu0 0.0
  %590 = vmatpush1.msra.mxu0 0.0
  %591 = vmatprep.subr.mxu0 0.0
  %592 = vmatpush1.msra.mxu0 0.0
  %593 = vmatprep.subr.mxu0 0.0
  %594 = vmatpush1.msra.mxu0 0.0
  %595 = vmatprep.subr.mxu0 0.0
  %596 = vmatpush1.msra.mxu0 0.0
  %597 = vmatprep.subr.mxu0 0.0
  %598 = vmatpush1.msra.mxu0 0.0
  %599 = vmatprep.subr.mxu0 0.0
  %600 = vmatpush1.msra.mxu0 0.0
  %601 = vmatprep.subr.mxu0 0.0
  %602 = vmatpush1.msra.mxu0 0.0
  %603 = vmatprep.subr.mxu0 0.0
  %604 = vmatpush1.msra.mxu0 0.0
  %605 = vmatprep.subr.mxu0 0.0
  %606 = vmatpush1.msra.mxu0 0.0
  %607 = vmatprep.mubr.f32.mxu0 0.0
  %608 = vmatmul.mubr.f32.gmra.mrb[0].mxu0 0.0
  %v609 = vpop.f32.mrb[0].mxu0
  %v610 = vadd.f32 %v465, %v609
  %v611 = vpop.f32.mrb[0].mxu0
  %612 = vdwg.mxu0
  %v613 = vadd.f32 %v469, %v539
  %v614 = vxor.u32 %v613, 2147483648
  %v615 = vmul.f32 %v614, 1.442695
  %v616 = vpow.pop %v615
  %v617 = vadd.f32 %v616, 1.0
  %v618 = vrcp.pop %v617
  %v619 = vmul.f32 1.0, %v618
  %v620 = vadd.f32 %v470, %v541
  %v621 = vxor.u32 %v620, 2147483648
  %v622 = vmul.f32 %v621, 1.442695
  %v623 = vpow.pop %v622
  %v624 = vadd.f32 %v623, 1.0
  %v625 = vrcp.pop %v624
  %v626 = vmul.f32 1.0, %v625
  %v627 = vmul.f32 %v619, %v610
  %v628 = vadd.f32 %v471, %v627
  %v629 = vtanh.pop %v628
  %v630 = vsub.f32 1.0, %v626
  %v631 = vmul.f32 %v630, %v629
  %v632 = vmul.f32 %v626, 0.0
  %v633 = vadd.f32 %v631, %v632
  %vm634 = vcmp.gt.s32.totalorder %v32, 0
  %v635 = vsel %vm634, 1, 0
  %636 = vset.pattern.permute.xlu0 0
  %637 = vperm.xlu0 %636, %v635
  %v638 = vpop.permute.xlu0 %637
  %vm639 = vcmp.eq.s32.totalorder %v638, 1
  %v640 = vsel %vm639, %v633, 0.0
  %s641 = scalar_lea.vmem [#allocation2], 24
  %v642 = vld [vmem:[%s641] sm:$0xff]
  %v643 = vld [vmem:[%s641 + $0x8] sm:$0xff]
  %v644 = vld [vmem:[%s641 + $0x10] sm:$0xff]
  %645 = vmatprep.subr.mxu0 %v405
  %646 = vmatpush1.msra.mxu0 %v404
  %647 = vmatprep.subr.mxu0 %v408
  %648 = vmatpush1.msra.mxu0 %v407
  %649 = vmatprep.subr.mxu0 %v411
  %650 = vmatpush1.msra.mxu0 %v410
  %651 = vmatprep.subr.mxu0 %v414
  %652 = vmatpush1.msra.mxu0 %v413
  %653 = vmatprep.subr.mxu0 %v417
  %654 = vmatpush1.msra.mxu0 %v416
  %655 = vmatprep.subr.mxu0 %v420
  %656 = vmatpush1.msra.mxu0 %v419
  %657 = vmatprep.subr.mxu0 %v423
  %658 = vmatpush1.msra.mxu0 %v422
  %659 = vmatprep.subr.mxu0 %v426
  %660 = vmatpush1.msra.mxu0 %v425
  %661 = vmatprep.subr.mxu0 %v429
  %662 = vmatpush1.msra.mxu0 %v428
  %663 = vmatprep.subr.mxu0 %v432
  %664 = vmatpush1.msra.mxu0 %v431
  %665 = vmatprep.subr.mxu0 %v435
  %666 = vmatpush1.msra.mxu0 %v434
  %667 = vmatprep.subr.mxu0 %v438
  %668 = vmatpush1.msra.mxu0 %v437
  %669 = vmatprep.subr.mxu0 %v441
  %670 = vmatpush1.msra.mxu0 %v440
  %671 = vmatprep.subr.mxu0 %v444
  %672 = vmatpush1.msra.mxu0 %v443
  %673 = vmatprep.subr.mxu0 %v447
  %674 = vmatpush1.msra.mxu0 %v446
  %675 = vmatprep.subr.mxu0 %v450
  %676 = vmatpush1.msra.mxu0 %v449
  %677 = vmatprep.subr.mxu0 0.0
  %678 = vmatpush1.msra.mxu0 0.0
  %679 = vmatprep.subr.mxu0 0.0
  %680 = vmatpush1.msra.mxu0 0.0
  %681 = vmatprep.subr.mxu0 0.0
  %682 = vmatpush1.msra.mxu0 0.0
  %683 = vmatprep.subr.mxu0 0.0
  %684 = vmatpush1.msra.mxu0 0.0
  %685 = vmatprep.subr.mxu0 0.0
  %686 = vmatpush1.msra.mxu0 0.0
  %687 = vmatprep.subr.mxu0 0.0
  %688 = vmatpush1.msra.mxu0 0.0
  %689 = vmatprep.subr.mxu0 0.0
  %690 = vmatpush1.msra.mxu0 0.0
  %691 = vmatprep.subr.mxu0 0.0
  %692 = vmatpush1.msra.mxu0 0.0
  %693 = vmatprep.subr.mxu0 0.0
  %694 = vmatpush1.msra.mxu0 0.0
  %695 = vmatprep.subr.mxu0 0.0
  %696 = vmatpush1.msra.mxu0 0.0
  %697 = vmatprep.subr.mxu0 0.0
  %698 = vmatpush1.msra.mxu0 0.0
  %699 = vmatprep.subr.mxu0 0.0
  %700 = vmatpush1.msra.mxu0 0.0
  %701 = vmatprep.subr.mxu0 0.0
  %702 = vmatpush1.msra.mxu0 0.0
  %703 = vmatprep.subr.mxu0 0.0
  %704 = vmatpush1.msra.mxu0 0.0
  %705 = vmatprep.subr.mxu0 0.0
  %706 = vmatpush1.msra.mxu0 0.0
  %707 = vmatprep.subr.mxu0 0.0
  %708 = vmatpush1.msra.mxu0 0.0
  %709 = vmatprep.mubr.f32.mxu0 0.0
  %710 = vmatmul.mubr.f32.gmra.mrb[0].mxu0 %v640
  %v711 = vpop.f32.mrb[0].mxu0
  %v712 = vadd.f32 %v457, %v711
  %v713 = vpop.f32.mrb[0].mxu0
  %v714 = vadd.f32 %v461, %v713
  %715 = vdwg.mxu0
  %716 = vmatprep.subr.mxu0 0.0
  %717 = vmatpush1.msra.mxu0 %v406
  %718 = vmatprep.subr.mxu0 0.0
  %719 = vmatpush1.msra.mxu0 %v409
  %720 = vmatprep.subr.mxu0 0.0
  %721 = vmatpush1.msra.mxu0 %v412
  %722 = vmatprep.subr.mxu0 0.0
  %723 = vmatpush1.msra.mxu0 %v415
  %724 = vmatprep.subr.mxu0 0.0
  %725 = vmatpush1.msra.mxu0 %v418
  %726 = vmatprep.subr.mxu0 0.0
  %727 = vmatpush1.msra.mxu0 %v421
  %728 = vmatprep.subr.mxu0 0.0
  %729 = vmatpush1.msra.mxu0 %v424
  %730 = vmatprep.subr.mxu0 0.0
  %731 = vmatpush1.msra.mxu0 %v427
  %732 = vmatprep.subr.mxu0 0.0
  %733 = vmatpush1.msra.mxu0 %v430
  %734 = vmatprep.subr.mxu0 0.0
  %735 = vmatpush1.msra.mxu0 %v433
  %736 = vmatprep.subr.mxu0 0.0
  %737 = vmatpush1.msra.mxu0 %v436
  %738 = vmatprep.subr.mxu0 0.0
  %739 = vmatpush1.msra.mxu0 %v439
  %740 = vmatprep.subr.mxu0 0.0
  %741 = vmatpush1.msra.mxu0 %v442
  %742 = vmatprep.subr.mxu0 0.0
  %743 = vmatpush1.msra.mxu0 %v445
  %744 = vmatprep.subr.mxu0 0.0
  %745 = vmatpush1.msra.mxu0 %v448
  %746 = vmatprep.subr.mxu0 0.0
  %747 = vmatpush1.msra.mxu0 %v451
  %748 = vmatprep.subr.mxu0 0.0
  %749 = vmatpush1.msra.mxu0 0.0
  %750 = vmatprep.subr.mxu0 0.0
  %751 = vmatpush1.msra.mxu0 0.0
  %752 = vmatprep.subr.mxu0 0.0
  %753 = vmatpush1.msra.mxu0 0.0
  %754 = vmatprep.subr.mxu0 0.0
  %755 = vmatpush1.msra.mxu0 0.0
  %756 = vmatprep.subr.mxu0 0.0
  %757 = vmatpush1.msra.mxu0 0.0
  %758 = vmatprep.subr.mxu0 0.0
  %759 = vmatpush1.msra.mxu0 0.0
  %760 = vmatprep.subr.mxu0 0.0
  %761 = vmatpush1.msra.mxu0 0.0
  %762 = vmatprep.subr.mxu0 0.0
  %763 = vmatpush1.msra.mxu0 0.0
  %764 = vmatprep.subr.mxu0 0.0
  %765 = vmatpush1.msra.mxu0 0.0
  %766 = vmatprep.subr.mxu0 0.0
  %767 = vmatpush1.msra.mxu0 0.0
  %768 = vmatprep.subr.mxu0 0.0
  %769 = vmatpush1.msra.mxu0 0.0
  %770 = vmatprep.subr.mxu0 0.0
  %771 = vmatpush1.msra.mxu0 0.0
  %772 = vmatprep.subr.mxu0 0.0
  %773 = vmatpush1.msra.mxu0 0.0
  %774 = vmatprep.subr.mxu0 0.0
  %775 = vmatpush1.msra.mxu0 0.0
  %776 = vmatprep.subr.mxu0 0.0
  %777 = vmatpush1.msra.mxu0 0.0
  %778 = vmatprep.subr.mxu0 0.0
  %779 = vmatpush1.msra.mxu0 0.0
  %780 = vmatprep.mubr.f32.mxu0 0.0
  %781 = vmatmul.mubr.f32.gmra.mrb[0].mxu0 %v640
  %v782 = vpop.f32.mrb[0].mxu0
  %v783 = vadd.f32 %v465, %v782
  %v784 = vpop.f32.mrb[0].mxu0
  %785 = vdwg.mxu0
  %v786 = vadd.f32 %v642, %v712
  %v787 = vxor.u32 %v786, 2147483648
  %v788 = vmul.f32 %v787, 1.442695
  %v789 = vpow.pop %v788
  %v790 = vadd.f32 %v789, 1.0
  %v791 = vrcp.pop %v790
  %v792 = vmul.f32 1.0, %v791
  %v793 = vadd.f32 %v643, %v714
  %v794 = vxor.u32 %v793, 2147483648
  %v795 = vmul.f32 %v794, 1.442695
  %v796 = vpow.pop %v795
  %v797 = vadd.f32 %v796, 1.0
  %v798 = vrcp.pop %v797
  %v799 = vmul.f32 1.0, %v798
  %v800 = vmul.f32 %v792, %v783
  %v801 = vadd.f32 %v644, %v800
  %v802 = vtanh.pop %v801
  %v803 = vsub.f32 1.0, %v799
  %v804 = vmul.f32 %v803, %v802
  %v805 = vmul.f32 %v799, %v640
  %v806 = vadd.f32 %v804, %v805
  %vm807 = vcmp.gt.s32.totalorder %v32, 1
  %v808 = vsel %vm807, 1, 0
  %809 = vset.pattern.permute.xlu0 0
  %810 = vperm.xlu0 %809, %v808
  %v811 = vpop.permute.xlu0 %810
  %vm812 = vcmp.eq.s32.totalorder %v811, 1
  %v813 = vsel %vm812, %v806, %v640
  %s814 = scalar_lea.vmem [#allocation2], 48
  %v815 = vld [vmem:[%s814] sm:$0xff]
  %v816 = vld [vmem:[%s814 + $0x8] sm:$0xff]
  %v817 = vld [vmem:[%s814 + $0x10] sm:$0xff]
  %818 = vmatprep.subr.mxu0 %v405
  %819 = vmatpush1.msra.mxu0 %v404
  %820 = vmatprep.subr.mxu0 %v408
  %821 = vmatpush1.msra.mxu0 %v407
  %822 = vmatprep.subr.mxu0 %v411
  %823 = vmatpush1.msra.mxu0 %v410
  %824 = vmatprep.subr.mxu0 %v414
  %825 = vmatpush1.msra.mxu0 %v413
  %826 = vmatprep.subr.mxu0 %v417
  %827 = vmatpush1.msra.mxu0 %v416
  %828 = vmatprep.subr.mxu0 %v420
  %829 = vmatpush1.msra.mxu0 %v419
  %830 = vmatprep.subr.mxu0 %v423
  %831 = vmatpush1.msra.mxu0 %v422
  %832 = vmatprep.subr.mxu0 %v426
  %833 = vmatpush1.msra.mxu0 %v425
  %834 = vmatprep.subr.mxu0 %v429
  %835 = vmatpush1.msra.mxu0 %v428
  %836 = vmatprep.subr.mxu0 %v432
  %837 = vmatpush1.msra.mxu0 %v431
  %838 = vmatprep.subr.mxu0 %v435
  %839 = vmatpush1.msra.mxu0 %v434
  %840 = vmatprep.subr.mxu0 %v438
  %841 = vmatpush1.msra.mxu0 %v437
  %842 = vmatprep.subr.mxu0 %v441
  %843 = vmatpush1.msra.mxu0 %v440
  %844 = vmatprep.subr.mxu0 %v444
  %845 = vmatpush1.msra.mxu0 %v443
  %846 = vmatprep.subr.mxu0 %v447
  %847 = vmatpush1.msra.mxu0 %v446
  %848 = vmatprep.subr.mxu0 %v450
  %849 = vmatpush1.msra.mxu0 %v449
  %850 = vmatprep.subr.mxu0 0.0
  %851 = vmatpush1.msra.mxu0 0.0
  %852 = vmatprep.subr.mxu0 0.0
  %853 = vmatpush1.msra.mxu0 0.0
  %854 = vmatprep.subr.mxu0 0.0
  %855 = vmatpush1.msra.mxu0 0.0
  %856 = vmatprep.subr.mxu0 0.0
  %857 = vmatpush1.msra.mxu0 0.0
  %858 = vmatprep.subr.mxu0 0.0
  %859 = vmatpush1.msra.mxu0 0.0
  %860 = vmatprep.subr.mxu0 0.0
  %861 = vmatpush1.msra.mxu0 0.0
  %862 = vmatprep.subr.mxu0 0.0
  %863 = vmatpush1.msra.mxu0 0.0
  %864 = vmatprep.subr.mxu0 0.0
  %865 = vmatpush1.msra.mxu0 0.0
  %866 = vmatprep.subr.mxu0 0.0
  %867 = vmatpush1.msra.mxu0 0.0
  %868 = vmatprep.subr.mxu0 0.0
  %869 = vmatpush1.msra.mxu0 0.0
  %870 = vmatprep.subr.mxu0 0.0
  %871 = vmatpush1.msra.mxu0 0.0
  %872 = vmatprep.subr.mxu0 0.0
  %873 = vmatpush1.msra.mxu0 0.0
  %874 = vmatprep.subr.mxu0 0.0
  %875 = vmatpush1.msra.mxu0 0.0
  %876 = vmatprep.subr.mxu0 0.0
  %877 = vmatpush1.msra.mxu0 0.0
  %878 = vmatprep.subr.mxu0 0.0
  %879 = vmatpush1.msra.mxu0 0.0
  %880 = vmatprep.subr.mxu0 0.0
  %881 = vmatpush1.msra.mxu0 0.0
  %882 = vmatprep.mubr.f32.mxu0 0.0
  %883 = vmatmul.mubr.f32.gmra.mrb[0].mxu0 %v813
  %v884 = vpop.f32.mrb[0].mxu0
  %v885 = vadd.f32 %v457, %v884
  %v886 = vpop.f32.mrb[0].mxu0
  %v887 = vadd.f32 %v461, %v886
  %888 = vdwg.mxu0
  %889 = vmatprep.subr.mxu0 0.0
  %890 = vmatpush1.msra.mxu0 %v406
  %891 = vmatprep.subr.mxu0 0.0
  %892 = vmatpush1.msra.mxu0 %v409
  %893 = vmatprep.subr.mxu0 0.0
  %894 = vmatpush1.msra.mxu0 %v412
  %895 = vmatprep.subr.mxu0 0.0
  %896 = vmatpush1.msra.mxu0 %v415
  %897 = vmatprep.subr.mxu0 0.0
  %898 = vmatpush1.msra.mxu0 %v418
  %899 = vmatprep.subr.mxu0 0.0
  %900 = vmatpush1.msra.mxu0 %v421
  %901 = vmatprep.subr.mxu0 0.0
  %902 = vmatpush1.msra.mxu0 %v424
  %903 = vmatprep.subr.mxu0 0.0
  %904 = vmatpush1.msra.mxu0 %v427
  %905 = vmatprep.subr.mxu0 0.0
  %906 = vmatpush1.msra.mxu0 %v430
  %907 = vmatprep.subr.mxu0 0.0
  %908 = vmatpush1.msra.mxu0 %v433
  %909 = vmatprep.subr.mxu0 0.0
  %910 = vmatpush1.msra.mxu0 %v436
  %911 = vmatprep.subr.mxu0 0.0
  %912 = vmatpush1.msra.mxu0 %v439
  %913 = vmatprep.subr.mxu0 0.0
  %914 = vmatpush1.msra.mxu0 %v442
  %915 = vmatprep.subr.mxu0 0.0
  %916 = vmatpush1.msra.mxu0 %v445
  %917 = vmatprep.subr.mxu0 0.0
  %918 = vmatpush1.msra.mxu0 %v448
  %919 = vmatprep.subr.mxu0 0.0
  %920 = vmatpush1.msra.mxu0 %v451
  %921 = vmatprep.subr.mxu0 0.0
  %922 = vmatpush1.msra.mxu0 0.0
  %923 = vmatprep.subr.mxu0 0.0
  %924 = vmatpush1.msra.mxu0 0.0
  %925 = vmatprep.subr.mxu0 0.0
  %926 = vmatpush1.msra.mxu0 0.0
  %927 = vmatprep.subr.mxu0 0.0
  %928 = vmatpush1.msra.mxu0 0.0
  %929 = vmatprep.subr.mxu0 0.0
  %930 = vmatpush1.msra.mxu0 0.0
  %931 = vmatprep.subr.mxu0 0.0
  %932 = vmatpush1.msra.mxu0 0.0
  %933 = vmatprep.subr.mxu0 0.0
  %934 = vmatpush1.msra.mxu0 0.0
  %935 = vmatprep.subr.mxu0 0.0
  %936 = vmatpush1.msra.mxu0 0.0
  %937 = vmatprep.subr.mxu0 0.0
  %938 = vmatpush1.msra.mxu0 0.0
  %939 = vmatprep.subr.mxu0 0.0
  %940 = vmatpush1.msra.mxu0 0.0
  %941 = vmatprep.subr.mxu0 0.0
  %942 = vmatpush1.msra.mxu0 0.0
  %943 = vmatprep.subr.mxu0 0.0
  %944 = vmatpush1.msra.mxu0 0.0
  %945 = vmatprep.subr.mxu0 0.0
  %946 = vmatpush1.msra.mxu0 0.0
  %947 = vmatprep.subr.mxu0 0.0
  %948 = vmatpush1.msra.mxu0 0.0
  %949 = vmatprep.subr.mxu0 0.0
  %950 = vmatpush1.msra.mxu0 0.0
  %951 = vmatprep.subr.mxu0 0.0
  %952 = vmatpush1.msra.mxu0 0.0
  %953 = vmatprep.mubr.f32.mxu0 0.0
  %954 = vmatmul.mubr.f32.gmra.mrb[0].mxu0 %v813
  %v955 = vpop.f32.mrb[0].mxu0
  %v956 = vadd.f32 %v465, %v955
  %v957 = vpop.f32.mrb[0].mxu0
  %958 = vdwg.mxu0
  %v959 = vadd.f32 %v815, %v885
  %v960 = vxor.u32 %v959, 2147483648
  %v961 = vmul.f32 %v960, 1.442695
  %v962 = vpow.pop %v961
  %v963 = vadd.f32 %v962, 1.0
  %v964 = vrcp.pop %v963
  %v965 = vmul.f32 1.0, %v964
  %v966 = vadd.f32 %v816, %v887
  %v967 = vxor.u32 %v966, 2147483648
  %v968 = vmul.f32 %v967, 1.442695
  %v969 = vpow.pop %v968
  %v970 = vadd.f32 %v969, 1.0
  %v971 = vrcp.pop %v970
  %v972 = vmul.f32 1.0, %v971
  %v973 = vmul.f32 %v965, %v956
  %v974 = vadd.f32 %v817, %v973
  %v975 = vtanh.pop %v974
  %v976 = vsub.f32 1.0, %v972
  %v977 = vmul.f32 %v976, %v975
  %v978 = vmul.f32 %v972, %v813
  %v979 = vadd.f32 %v977, %v978
  %vm980 = vcmp.gt.s32.totalorder %v32, 2
  %v981 = vsel %vm980, 1, 0
  %982 = vset.pattern.permute.xlu0 0
  %983 = vperm.xlu0 %982, %v981
  %v984 = vpop.permute.xlu0 %983
  %vm985 = vcmp.eq.s32.totalorder %v984, 1
  %v986 = vsel %vm985, %v979, %v813
  %s987 = scalar_lea.vmem [#allocation2], 72
  %v988 = vld [vmem:[%s987] sm:$0xff]
  %v989 = vld [vmem:[%s987 + $0x8] sm:$0xff]
  %v990 = vld [vmem:[%s987 + $0x10] sm:$0xff]
  %991 = vmatprep.subr.mxu0 %v405
  %992 = vmatpush1.msra.mxu0 %v404
  %993 = vmatprep.subr.mxu0 %v408
  %994 = vmatpush1.msra.mxu0 %v407
  %995 = vmatprep.subr.mxu0 %v411
  %996 = vmatpush1.msra.mxu0 %v410
  %997 = vmatprep.subr.mxu0 %v414
  %998 = vmatpush1.msra.mxu0 %v413
  %999 = vmatprep.subr.mxu0 %v417
  %1000 = vmatpush1.msra.mxu0 %v416
  %1001 = vmatprep.subr.mxu0 %v420
  %1002 = vmatpush1.msra.mxu0 %v419
  %1003 = vmatprep.subr.mxu0 %v423
  %1004 = vmatpush1.msra.mxu0 %v422
  %1005 = vmatprep.subr.mxu0 %v426
  %1006 = vmatpush1.msra.mxu0 %v425
  %1007 = vmatprep.subr.mxu0 %v429
  %1008 = vmatpush1.msra.mxu0 %v428
  %1009 = vmatprep.subr.mxu0 %v432
  %1010 = vmatpush1.msra.mxu0 %v431
  %1011 = vmatprep.subr.mxu0 %v435
  %1012 = vmatpush1.msra.mxu0 %v434
  %1013 = vmatprep.subr.mxu0 %v438
  %1014 = vmatpush1.msra.mxu0 %v437
  %1015 = vmatprep.subr.mxu0 %v441
  %1016 = vmatpush1.msra.mxu0 %v440
  %1017 = vmatprep.subr.mxu0 %v444
  %1018 = vmatpush1.msra.mxu0 %v443
  %1019 = vmatprep.subr.mxu0 %v447
  %1020 = vmatpush1.msra.mxu0 %v446
  %1021 = vmatprep.subr.mxu0 %v450
  %1022 = vmatpush1.msra.mxu0 %v449
  %1023 = vmatprep.subr.mxu0 0.0
  %1024 = vmatpush1.msra.mxu0 0.0
  %1025 = vmatprep.subr.mxu0 0.0
  %1026 = vmatpush1.msra.mxu0 0.0
  %1027 = vmatprep.subr.mxu0 0.0
  %1028 = vmatpush1.msra.mxu0 0.0
  %1029 = vmatprep.subr.mxu0 0.0
  %1030 = vmatpush1.msra.mxu0 0.0
  %1031 = vmatprep.subr.mxu0 0.0
  %1032 = vmatpush1.msra.mxu0 0.0
  %1033 = vmatprep.subr.mxu0 0.0
  %1034 = vmatpush1.msra.mxu0 0.0
  %1035 = vmatprep.subr.mxu0 0.0
  %1036 = vmatpush1.msra.mxu0 0.0
  %1037 = vmatprep.subr.mxu0 0.0
  %1038 = vmatpush1.msra.mxu0 0.0
  %1039 = vmatprep.subr.mxu0 0.0
  %1040 = vmatpush1.msra.mxu0 0.0
  %1041 = vmatprep.subr.mxu0 0.0
  %1042 = vmatpush1.msra.mxu0 0.0
  %1043 = vmatprep.subr.mxu0 0.0
  %1044 = vmatpush1.msra.mxu0 0.0
  %1045 = vmatprep.subr.mxu0 0.0
  %1046 = vmatpush1.msra.mxu0 0.0
  %1047 = vmatprep.subr.mxu0 0.0
  %1048 = vmatpush1.msra.mxu0 0.0
  %1049 = vmatprep.subr.mxu0 0.0
  %1050 = vmatpush1.msra.mxu0 0.0
  %1051 = vmatprep.subr.mxu0 0.0
  %1052 = vmatpush1.msra.mxu0 0.0
  %1053 = vmatprep.subr.mxu0 0.0
  %1054 = vmatpush1.msra.mxu0 0.0
  %1055 = vmatprep.mubr.f32.mxu0 0.0
  %1056 = vmatmul.mubr.f32.gmra.mrb[0].mxu0 %v986
  %v1057 = vpop.f32.mrb[0].mxu0
  %v1058 = vadd.f32 %v457, %v1057
  %v1059 = vpop.f32.mrb[0].mxu0
  %v1060 = vadd.f32 %v461, %v1059
  %1061 = vdwg.mxu0
  %1062 = vmatprep.subr.mxu0 0.0
  %1063 = vmatpush1.msra.mxu0 %v406
  %1064 = vmatprep.subr.mxu0 0.0
  %1065 = vmatpush1.msra.mxu0 %v409
  %1066 = vmatprep.subr.mxu0 0.0
  %1067 = vmatpush1.msra.mxu0 %v412
  %1068 = vmatprep.subr.mxu0 0.0
  %1069 = vmatpush1.msra.mxu0 %v415
  %1070 = vmatprep.subr.mxu0 0.0
  %1071 = vmatpush1.msra.mxu0 %v418
  %1072 = vmatprep.subr.mxu0 0.0
  %1073 = vmatpush1.msra.mxu0 %v421
  %1074 = vmatprep.subr.mxu0 0.0
  %1075 = vmatpush1.msra.mxu0 %v424
  %1076 = vmatprep.subr.mxu0 0.0
  %1077 = vmatpush1.msra.mxu0 %v427
  %1078 = vmatprep.subr.mxu0 0.0
  %1079 = vmatpush1.msra.mxu0 %v430
  %1080 = vmatprep.subr.mxu0 0.0
  %1081 = vmatpush1.msra.mxu0 %v433
  %1082 = vmatprep.subr.mxu0 0.0
  %1083 = vmatpush1.msra.mxu0 %v436
  %1084 = vmatprep.subr.mxu0 0.0
  %1085 = vmatpush1.msra.mxu0 %v439
  %1086 = vmatprep.subr.mxu0 0.0
  %1087 = vmatpush1.msra.mxu0 %v442
  %1088 = vmatprep.subr.mxu0 0.0
  %1089 = vmatpush1.msra.mxu0 %v445
  %1090 = vmatprep.subr.mxu0 0.0
  %1091 = vmatpush1.msra.mxu0 %v448
  %1092 = vmatprep.subr.mxu0 0.0
  %1093 = vmatpush1.msra.mxu0 %v451
  %1094 = vmatprep.subr.mxu0 0.0
  %1095 = vmatpush1.msra.mxu0 0.0
  %1096 = vmatprep.subr.mxu0 0.0
  %1097 = vmatpush1.msra.mxu0 0.0
  %1098 = vmatprep.subr.mxu0 0.0
  %1099 = vmatpush1.msra.mxu0 0.0
  %1100 = vmatprep.subr.mxu0 0.0
  %1101 = vmatpush1.msra.mxu0 0.0
  %1102 = vmatprep.subr.mxu0 0.0
  %1103 = vmatpush1.msra.mxu0 0.0
  %1104 = vmatprep.subr.mxu0 0.0
  %1105 = vmatpush1.msra.mxu0 0.0
  %1106 = vmatprep.subr.mxu0 0.0
  %1107 = vmatpush1.msra.mxu0 0.0
  %1108 = vmatprep.subr.mxu0 0.0
  %1109 = vmatpush1.msra.mxu0 0.0
  %1110 = vmatprep.subr.mxu0 0.0
  %1111 = vmatpush1.msra.mxu0 0.0
  %1112 = vmatprep.subr.mxu0 0.0
  %1113 = vmatpush1.msra.mxu0 0.0
  %1114 = vmatprep.subr.mxu0 0.0
  %1115 = vmatpush1.msra.mxu0 0.0
  %1116 = vmatprep.subr.mxu0 0.0
  %1117 = vmatpush1.msra.mxu0 0.0
  %1118 = vmatprep.subr.mxu0 0.0
  %1119 = vmatpush1.msra.mxu0 0.0
  %1120 = vmatprep.subr.mxu0 0.0
  %1121 = vmatpush1.msra.mxu0 0.0
  %1122 = vmatprep.subr.mxu0 0.0
  %1123 = vmatpush1.msra.mxu0 0.0
  %1124 = vmatprep.subr.mxu0 0.0
  %1125 = vmatpush1.msra.mxu0 0.0
  %1126 = vmatprep.mubr.f32.mxu0 0.0
  %1127 = vmatmul.mubr.f32.gmra.mrb[0].mxu0 %v986
  %v1128 = vpop.f32.mrb[0].mxu0
  %v1129 = vadd.f32 %v465, %v1128
  %v1130 = vpop.f32.mrb[0].mxu0
  %1131 = vdwg.mxu0
  %v1132 = vadd.f32 %v988, %v1058
  %v1133 = vxor.u32 %v1132, 2147483648
  %v1134 = vmul.f32 %v1133, 1.442695
  %v1135 = vpow.pop %v1134
  %v1136 = vadd.f32 %v1135, 1.0
  %v1137 = vrcp.pop %v1136
  %v1138 = vmul.f32 1.0, %v1137
  %v1139 = vadd.f32 %v989, %v1060
  %v1140 = vxor.u32 %v1139, 2147483648
  %v1141 = vmul.f32 %v1140, 1.442695
  %v1142 = vpow.pop %v1141
  %v1143 = vadd.f32 %v1142, 1.0
  %v1144 = vrcp.pop %v1143
  %v1145 = vmul.f32 1.0, %v1144
  %v1146 = vmul.f32 %v1138, %v1129
  %v1147 = vadd.f32 %v990, %v1146
  %v1148 = vtanh.pop %v1147
  %v1149 = vsub.f32 1.0, %v1145
  %v1150 = vmul.f32 %v1149, %v1148
  %v1151 = vmul.f32 %v1145, %v986
  %v1152 = vadd.f32 %v1150, %v1151
  %vm1153 = vcmp.gt.s32.totalorder %v32, 3
  %v1154 = vsel %vm1153, 1, 0
  %1155 = vset.pattern.permute.xlu0 0
  %1156 = vperm.xlu0 %1155, %v1154
  %v1157 = vpop.permute.xlu0 %1156
  %vm1158 = vcmp.eq.s32.totalorder %v1157, 1
  %v1159 = vsel %vm1158, %v1152, %v986
  %s1160 = scalar_lea.vmem [#allocation2], 96
  %v1161 = vld [vmem:[%s1160] sm:$0xff]
  %v1162 = vld [vmem:[%s1160 + $0x8] sm:$0xff]
  %v1163 = vld [vmem:[%s1160 + $0x10] sm:$0xff]
  %1164 = vmatprep.subr.mxu0 %v405
  %1165 = vmatpush1.msra.mxu0 %v404
  %1166 = vmatprep.subr.mxu0 %v408
  %1167 = vmatpush1.msra.mxu0 %v407
  %1168 = vmatprep.subr.mxu0 %v411
  %1169 = vmatpush1.msra.mxu0 %v410
  %1170 = vmatprep.subr.mxu0 %v414
  %1171 = vmatpush1.msra.mxu0 %v413
  %1172 = vmatprep.subr.mxu0 %v417
  %1173 = vmatpush1.msra.mxu0 %v416
  %1174 = vmatprep.subr.mxu0 %v420
  %1175 = vmatpush1.msra.mxu0 %v419
  %1176 = vmatprep.subr.mxu0 %v423
  %1177 = vmatpush1.msra.mxu0 %v422
  %1178 = vmatprep.subr.mxu0 %v426
  %1179 = vmatpush1.msra.mxu0 %v425
  %1180 = vmatprep.subr.mxu0 %v429
  %1181 = vmatpush1.msra.mxu0 %v428
  %1182 = vmatprep.subr.mxu0 %v432
  %1183 = vmatpush1.msra.mxu0 %v431
  %1184 = vmatprep.subr.mxu0 %v435
  %1185 = vmatpush1.msra.mxu0 %v434
  %1186 = vmatprep.subr.mxu0 %v438
  %1187 = vmatpush1.msra.mxu0 %v437
  %1188 = vmatprep.subr.mxu0 %v441
  %1189 = vmatpush1.msra.mxu0 %v440
  %1190 = vmatprep.subr.mxu0 %v444
  %1191 = vmatpush1.msra.mxu0 %v443
  %1192 = vmatprep.subr.mxu0 %v447
  %1193 = vmatpush1.msra.mxu0 %v446
  %1194 = vmatprep.subr.mxu0 %v450
  %1195 = vmatpush1.msra.mxu0 %v449
  %1196 = vmatprep.subr.mxu0 0.0
  %1197 = vmatpush1.msra.mxu0 0.0
  %1198 = vmatprep.subr.mxu0 0.0
  %1199 = vmatpush1.msra.mxu0 0.0
  %1200 = vmatprep.subr.mxu0 0.0
  %1201 = vmatpush1.msra.mxu0 0.0
  %1202 = vmatprep.subr.mxu0 0.0
  %1203 = vmatpush1.msra.mxu0 0.0
  %1204 = vmatprep.subr.mxu0 0.0
  %1205 = vmatpush1.msra.mxu0 0.0
  %1206 = vmatprep.subr.mxu0 0.0
  %1207 = vmatpush1.msra.mxu0 0.0
  %1208 = vmatprep.subr.mxu0 0.0
  %1209 = vmatpush1.msra.mxu0 0.0
  %1210 = vmatprep.subr.mxu0 0.0
  %1211 = vmatpush1.msra.mxu0 0.0
  %1212 = vmatprep.subr.mxu0 0.0
  %1213 = vmatpush1.msra.mxu0 0.0
  %1214 = vmatprep.subr.mxu0 0.0
  %1215 = vmatpush1.msra.mxu0 0.0
  %1216 = vmatprep.subr.mxu0 0.0
  %1217 = vmatpush1.msra.mxu0 0.0
  %1218 = vmatprep.subr.mxu0 0.0
  %1219 = vmatpush1.msra.mxu0 0.0
  %1220 = vmatprep.subr.mxu0 0.0
  %1221 = vmatpush1.msra.mxu0 0.0
  %1222 = vmatprep.subr.mxu0 0.0
  %1223 = vmatpush1.msra.mxu0 0.0
  %1224 = vmatprep.subr.mxu0 0.0
  %1225 = vmatpush1.msra.mxu0 0.0
  %1226 = vmatprep.subr.mxu0 0.0
  %1227 = vmatpush1.msra.mxu0 0.0
  %1228 = vmatprep.mubr.f32.mxu0 0.0
  %1229 = vmatmul.mubr.f32.gmra.mrb[0].mxu0 %v1159
  %v1230 = vpop.f32.mrb[0].mxu0
  %v1231 = vadd.f32 %v457, %v1230
  %v1232 = vpop.f32.mrb[0].mxu0
  %v1233 = vadd.f32 %v461, %v1232
  %1234 = vdwg.mxu0
  %1235 = vmatprep.subr.mxu0 0.0
  %1236 = vmatpush1.msra.mxu0 %v406
  %1237 = vmatprep.subr.mxu0 0.0
  %1238 = vmatpush1.msra.mxu0 %v409
  %1239 = vmatprep.subr.mxu0 0.0
  %1240 = vmatpush1.msra.mxu0 %v412
  %1241 = vmatprep.subr.mxu0 0.0
  %1242 = vmatpush1.msra.mxu0 %v415
  %1243 = vmatprep.subr.mxu0 0.0
  %1244 = vmatpush1.msra.mxu0 %v418
  %1245 = vmatprep.subr.mxu0 0.0
  %1246 = vmatpush1.msra.mxu0 %v421
  %1247 = vmatprep.subr.mxu0 0.0
  %1248 = vmatpush1.msra.mxu0 %v424
  %1249 = vmatprep.subr.mxu0 0.0
  %1250 = vmatpush1.msra.mxu0 %v427
  %1251 = vmatprep.subr.mxu0 0.0
  %1252 = vmatpush1.msra.mxu0 %v430
  %1253 = vmatprep.subr.mxu0 0.0
  %1254 = vmatpush1.msra.mxu0 %v433
  %1255 = vmatprep.subr.mxu0 0.0
  %1256 = vmatpush1.msra.mxu0 %v436
  %1257 = vmatprep.subr.mxu0 0.0
  %1258 = vmatpush1.msra.mxu0 %v439
  %1259 = vmatprep.subr.mxu0 0.0
  %1260 = vmatpush1.msra.mxu0 %v442
  %1261 = vmatprep.subr.mxu0 0.0
  %1262 = vmatpush1.msra.mxu0 %v445
  %1263 = vmatprep.subr.mxu0 0.0
  %1264 = vmatpush1.msra.mxu0 %v448
  %1265 = vmatprep.subr.mxu0 0.0
  %1266 = vmatpush1.msra.mxu0 %v451
  %1267 = vmatprep.subr.mxu0 0.0
  %1268 = vmatpush1.msra.mxu0 0.0
  %1269 = vmatprep.subr.mxu0 0.0
  %1270 = vmatpush1.msra.mxu0 0.0
  %1271 = vmatprep.subr.mxu0 0.0
  %1272 = vmatpush1.msra.mxu0 0.0
  %1273 = vmatprep.subr.mxu0 0.0
  %1274 = vmatpush1.msra.mxu0 0.0
  %1275 = vmatprep.subr.mxu0 0.0
  %1276 = vmatpush1.msra.mxu0 0.0
  %1277 = vmatprep.subr.mxu0 0.0
  %1278 = vmatpush1.msra.mxu0 0.0
  %1279 = vmatprep.subr.mxu0 0.0
  %1280 = vmatpush1.msra.mxu0 0.0
  %1281 = vmatprep.subr.mxu0 0.0
  %1282 = vmatpush1.msra.mxu0 0.0
  %1283 = vmatprep.subr.mxu0 0.0
  %1284 = vmatpush1.msra.mxu0 0.0
  %1285 = vmatprep.subr.mxu0 0.0
  %1286 = vmatpush1.msra.mxu0 0.0
  %1287 = vmatprep.subr.mxu0 0.0
  %1288 = vmatpush1.msra.mxu0 0.0
  %1289 = vmatprep.subr.mxu0 0.0
  %1290 = vmatpush1.msra.mxu0 0.0
  %1291 = vmatprep.subr.mxu0 0.0
  %1292 = vmatpush1.msra.mxu0 0.0
  %1293 = vmatprep.subr.mxu0 0.0
  %1294 = vmatpush1.msra.mxu0 0.0
  %1295 = vmatprep.subr.mxu0 0.0
  %1296 = vmatpush1.msra.mxu0 0.0
  %1297 = vmatprep.subr.mxu0 0.0
  %1298 = vmatpush1.msra.mxu0 0.0
  %1299 = vmatprep.mubr.f32.mxu0 0.0
  %1300 = vmatmul.mubr.f32.gmra.mrb[0].mxu0 %v1159
  %v1301 = vpop.f32.mrb[0].mxu0
  %v1302 = vadd.f32 %v465, %v1301
  %v1303 = vpop.f32.mrb[0].mxu0
  %1304 = vdwg.mxu0
  %v1305 = vadd.f32 %v1161, %v1231
  %v1306 = vxor.u32 %v1305, 2147483648
  %v1307 = vmul.f32 %v1306, 1.442695
  %v1308 = vpow.pop %v1307
  %v1309 = vadd.f32 %v1308, 1.0
  %v1310 = vrcp.pop %v1309
  %v1311 = vmul.f32 1.0, %v1310
  %v1312 = vadd.f32 %v1162, %v1233
  %v1313 = vxor.u32 %v1312, 2147483648
  %v1314 = vmul.f32 %v1313, 1.442695
  %v1315 = vpow.pop %v1314
  %v1316 = vadd.f32 %v1315, 1.0
  %v1317 = vrcp.pop %v1316
  %v1318 = vmul.f32 1.0, %v1317
  %v1319 = vmul.f32 %v1311, %v1302
  %v1320 = vadd.f32 %v1163, %v1319
  %v1321 = vtanh.pop %v1320
  %v1322 = vsub.f32 1.0, %v1318
  %v1323 = vmul.f32 %v1322, %v1321
  %v1324 = vmul.f32 %v1318, %v1159
  %v1325 = vadd.f32 %v1323, %v1324
  %vm1326 = vcmp.gt.s32.totalorder %v32, 4
  %v1327 = vsel %vm1326, 1, 0
  %1328 = vset.pattern.permute.xlu0 0
  %1329 = vperm.xlu0 %1328, %v1327
  %v1330 = vpop.permute.xlu0 %1329
  %vm1331 = vcmp.eq.s32.totalorder %v1330, 1
  %v1332 = vsel %vm1331, %v1325, %v1159
  %s1333 = scalar_lea.vmem [#allocation2], 120
  %v1334 = vld [vmem:[%s1333] sm:$0xff]
  %v1335 = vld [vmem:[%s1333 + $0x8] sm:$0xff]
  %v1336 = vld [vmem:[%s1333 + $0x10] sm:$0xff]
  %1337 = vmatprep.subr.mxu0 %v405
  %1338 = vmatpush1.msra.mxu0 %v404
  %1339 = vmatprep.subr.mxu0 %v408
  %1340 = vmatpush1.msra.mxu0 %v407
  %1341 = vmatprep.subr.mxu0 %v411
  %1342 = vmatpush1.msra.mxu0 %v410
  %1343 = vmatprep.subr.mxu0 %v414
  %1344 = vmatpush1.msra.mxu0 %v413
  %1345 = vmatprep.subr.mxu0 %v417
  %1346 = vmatpush1.msra.mxu0 %v416
  %1347 = vmatprep.subr.mxu0 %v420
  %1348 = vmatpush1.msra.mxu0 %v419
  %1349 = vmatprep.subr.mxu0 %v423
  %1350 = vmatpush1.msra.mxu0 %v422
  %1351 = vmatprep.subr.mxu0 %v426
  %1352 = vmatpush1.msra.mxu0 %v425
  %1353 = vmatprep.subr.mxu0 %v429
  %1354 = vmatpush1.msra.mxu0 %v428
  %1355 = vmatprep.subr.mxu0 %v432
  %1356 = vmatpush1.msra.mxu0 %v431
  %1357 = vmatprep.subr.mxu0 %v435
  %1358 = vmatpush1.msra.mxu0 %v434
  %1359 = vmatprep.subr.mxu0 %v438
  %1360 = vmatpush1.msra.mxu0 %v437
  %1361 = vmatprep.subr.mxu0 %v441
  %1362 = vmatpush1.msra.mxu0 %v440
  %1363 = vmatprep.subr.mxu0 %v444
  %1364 = vmatpush1.msra.mxu0 %v443
  %1365 = vmatprep.subr.mxu0 %v447
  %1366 = vmatpush1.msra.mxu0 %v446
  %1367 = vmatprep.subr.mxu0 %v450
  %1368 = vmatpush1.msra.mxu0 %v449
  %1369 = vmatprep.subr.mxu0 0.0
  %1370 = vmatpush1.msra.mxu0 0.0
  %1371 = vmatprep.subr.mxu0 0.0
  %1372 = vmatpush1.msra.mxu0 0.0
  %1373 = vmatprep.subr.mxu0 0.0
  %1374 = vmatpush1.msra.mxu0 0.0
  %1375 = vmatprep.subr.mxu0 0.0
  %1376 = vmatpush1.msra.mxu0 0.0
  %1377 = vmatprep.subr.mxu0 0.0
  %1378 = vmatpush1.msra.mxu0 0.0
  %1379 = vmatprep.subr.mxu0 0.0
  %1380 = vmatpush1.msra.mxu0 0.0
  %1381 = vmatprep.subr.mxu0 0.0
  %1382 = vmatpush1.msra.mxu0 0.0
  %1383 = vmatprep.subr.mxu0 0.0
  %1384 = vmatpush1.msra.mxu0 0.0
  %1385 = vmatprep.subr.mxu0 0.0
  %1386 = vmatpush1.msra.mxu0 0.0
  %1387 = vmatprep.subr.mxu0 0.0
  %1388 = vmatpush1.msra.mxu0 0.0
  %1389 = vmatprep.subr.mxu0 0.0
  %1390 = vmatpush1.msra.mxu0 0.0
  %1391 = vmatprep.subr.mxu0 0.0
  %1392 = vmatpush1.msra.mxu0 0.0
  %1393 = vmatprep.subr.mxu0 0.0
  %1394 = vmatpush1.msra.mxu0 0.0
  %1395 = vmatprep.subr.mxu0 0.0
  %1396 = vmatpush1.msra.mxu0 0.0
  %1397 = vmatprep.subr.mxu0 0.0
  %1398 = vmatpush1.msra.mxu0 0.0
  %1399 = vmatprep.subr.mxu0 0.0
  %1400 = vmatpush1.msra.mxu0 0.0
  %1401 = vmatprep.mubr.f32.mxu0 0.0
  %1402 = vmatmul.mubr.f32.gmra.mrb[0].mxu0 %v1332
  %v1403 = vpop.f32.mrb[0].mxu0
  %v1404 = vadd.f32 %v457, %v1403
  %v1405 = vpop.f32.mrb[0].mxu0
  %v1406 = vadd.f32 %v461, %v1405
  %1407 = vdwg.mxu0
  %1408 = vmatprep.subr.mxu0 0.0
  %1409 = vmatpush1.msra.mxu0 %v406
  %1410 = vmatprep.subr.mxu0 0.0
  %1411 = vmatpush1.msra.mxu0 %v409
  %1412 = vmatprep.subr.mxu0 0.0
  %1413 = vmatpush1.msra.mxu0 %v412
  %1414 = vmatprep.subr.mxu0 0.0
  %1415 = vmatpush1.msra.mxu0 %v415
  %1416 = vmatprep.subr.mxu0 0.0
  %1417 = vmatpush1.msra.mxu0 %v418
  %1418 = vmatprep.subr.mxu0 0.0
  %1419 = vmatpush1.msra.mxu0 %v421
  %1420 = vmatprep.subr.mxu0 0.0
  %1421 = vmatpush1.msra.mxu0 %v424
  %1422 = vmatprep.subr.mxu0 0.0
  %1423 = vmatpush1.msra.mxu0 %v427
  %1424 = vmatprep.subr.mxu0 0.0
  %1425 = vmatpush1.msra.mxu0 %v430
  %1426 = vmatprep.subr.mxu0 0.0
  %1427 = vmatpush1.msra.mxu0 %v433
  %1428 = vmatprep.subr.mxu0 0.0
  %1429 = vmatpush1.msra.mxu0 %v436
  %1430 = vmatprep.subr.mxu0 0.0
  %1431 = vmatpush1.msra.mxu0 %v439
  %1432 = vmatprep.subr.mxu0 0.0
  %1433 = vmatpush1.msra.mxu0 %v442
  %1434 = vmatprep.subr.mxu0 0.0
  %1435 = vmatpush1.msra.mxu0 %v445
  %1436 = vmatprep.subr.mxu0 0.0
  %1437 = vmatpush1.msra.mxu0 %v448
  %1438 = vmatprep.subr.mxu0 0.0
  %1439 = vmatpush1.msra.mxu0 %v451
  %1440 = vmatprep.subr.mxu0 0.0
  %1441 = vmatpush1.msra.mxu0 0.0
  %1442 = vmatprep.subr.mxu0 0.0
  %1443 = vmatpush1.msra.mxu0 0.0
  %1444 = vmatprep.subr.mxu0 0.0
  %1445 = vmatpush1.msra.mxu0 0.0
  %1446 = vmatprep.subr.mxu0 0.0
  %1447 = vmatpush1.msra.mxu0 0.0
  %1448 = vmatprep.subr.mxu0 0.0
  %1449 = vmatpush1.msra.mxu0 0.0
  %1450 = vmatprep.subr.mxu0 0.0
  %1451 = vmatpush1.msra.mxu0 0.0
  %1452 = vmatprep.subr.mxu0 0.0
  %1453 = vmatpush1.msra.mxu0 0.0
  %1454 = vmatprep.subr.mxu0 0.0
  %1455 = vmatpush1.msra.mxu0 0.0
  %1456 = vmatprep.subr.mxu0 0.0
  %1457 = vmatpush1.msra.mxu0 0.0
  %1458 = vmatprep.subr.mxu0 0.0
  %1459 = vmatpush1.msra.mxu0 0.0
  %1460 = vmatprep.subr.mxu0 0.0
  %1461 = vmatpush1.msra.mxu0 0.0
  %1462 = vmatprep.subr.mxu0 0.0
  %1463 = vmatpush1.msra.mxu0 0.0
  %1464 = vmatprep.subr.mxu0 0.0
  %1465 = vmatpush1.msra.mxu0 0.0
  %1466 = vmatprep.subr.mxu0 0.0
  %1467 = vmatpush1.msra.mxu0 0.0
  %1468 = vmatprep.subr.mxu0 0.0
  %1469 = vmatpush1.msra.mxu0 0.0
  %1470 = vmatprep.subr.mxu0 0.0
  %1471 = vmatpush1.msra.mxu0 0.0
  %1472 = vmatprep.mubr.f32.mxu0 0.0
  %1473 = vmatmul.mubr.f32.gmra.mrb[0].mxu0 %v1332
  %v1474 = vpop.f32.mrb[0].mxu0
  %v1475 = vadd.f32 %v465, %v1474
  %v1476 = vpop.f32.mrb[0].mxu0
  %1477 = vdwg.mxu0
  %v1478 = vadd.f32 %v1334, %v1404
  %v1479 = vxor.u32 %v1478, 2147483648
  %v1480 = vmul.f32 %v1479, 1.442695
  %v1481 = vpow.pop %v1480
  %v1482 = vadd.f32 %v1481, 1.0
  %v1483 = vrcp.pop %v1482
  %v1484 = vmul.f32 1.0, %v1483
  %v1485 = vadd.f32 %v1335, %v1406
  %v1486 = vxor.u32 %v1485, 2147483648
  %v1487 = vmul.f32 %v1486, 1.442695
  %v1488 = vpow.pop %v1487
  %v1489 = vadd.f32 %v1488, 1.0
  %v1490 = vrcp.pop %v1489
  %v1491 = vmul.f32 1.0, %v1490
  %v1492 = vmul.f32 %v1484, %v1475
  %v1493 = vadd.f32 %v1336, %v1492
  %v1494 = vtanh.pop %v1493
  %v1495 = vsub.f32 1.0, %v1491
  %v1496 = vmul.f32 %v1495, %v1494
  %v1497 = vmul.f32 %v1491, %v1332
  %v1498 = vadd.f32 %v1496, %v1497
  %vm1499 = vcmp.gt.s32.totalorder %v32, 5
  %v1500 = vsel %vm1499, 1, 0
  %1501 = vset.pattern.permute.xlu0 0
  %1502 = vperm.xlu0 %1501, %v1500
  %v1503 = vpop.permute.xlu0 %1502
  %vm1504 = vcmp.eq.s32.totalorder %v1503, 1
  %v1505 = vsel %vm1504, %v1498, %v1332
  %s1506 = scalar_lea.vmem [#allocation2], 144
  %v1507 = vld [vmem:[%s1506] sm:$0xff]
  %v1508 = vld [vmem:[%s1506 + $0x8] sm:$0xff]
  %v1509 = vld [vmem:[%s1506 + $0x10] sm:$0xff]
  %1510 = vmatprep.subr.mxu0 %v405
  %1511 = vmatpush1.msra.mxu0 %v404
  %1512 = vmatprep.subr.mxu0 %v408
  %1513 = vmatpush1.msra.mxu0 %v407
  %1514 = vmatprep.subr.mxu0 %v411
  %1515 = vmatpush1.msra.mxu0 %v410
  %1516 = vmatprep.subr.mxu0 %v414
  %1517 = vmatpush1.msra.mxu0 %v413
  %1518 = vmatprep.subr.mxu0 %v417
  %1519 = vmatpush1.msra.mxu0 %v416
  %1520 = vmatprep.subr.mxu0 %v420
  %1521 = vmatpush1.msra.mxu0 %v419
  %1522 = vmatprep.subr.mxu0 %v423
  %1523 = vmatpush1.msra.mxu0 %v422
  %1524 = vmatprep.subr.mxu0 %v426
  %1525 = vmatpush1.msra.mxu0 %v425
  %1526 = vmatprep.subr.mxu0 %v429
  %1527 = vmatpush1.msra.mxu0 %v428
  %1528 = vmatprep.subr.mxu0 %v432
  %1529 = vmatpush1.msra.mxu0 %v431
  %1530 = vmatprep.subr.mxu0 %v435
  %1531 = vmatpush1.msra.mxu0 %v434
  %1532 = vmatprep.subr.mxu0 %v438
  %1533 = vmatpush1.msra.mxu0 %v437
  %1534 = vmatprep.subr.mxu0 %v441
  %1535 = vmatpush1.msra.mxu0 %v440
  %1536 = vmatprep.subr.mxu0 %v444
  %1537 = vmatpush1.msra.mxu0 %v443
  %1538 = vmatprep.subr.mxu0 %v447
  %1539 = vmatpush1.msra.mxu0 %v446
  %1540 = vmatprep.subr.mxu0 %v450
  %1541 = vmatpush1.msra.mxu0 %v449
  %1542 = vmatprep.subr.mxu0 0.0
  %1543 = vmatpush1.msra.mxu0 0.0
  %1544 = vmatprep.subr.mxu0 0.0
  %1545 = vmatpush1.msra.mxu0 0.0
  %1546 = vmatprep.subr.mxu0 0.0
  %1547 = vmatpush1.msra.mxu0 0.0
  %1548 = vmatprep.subr.mxu0 0.0
  %1549 = vmatpush1.msra.mxu0 0.0
  %1550 = vmatprep.subr.mxu0 0.0
  %1551 = vmatpush1.msra.mxu0 0.0
  %1552 = vmatprep.subr.mxu0 0.0
  %1553 = vmatpush1.msra.mxu0 0.0
  %1554 = vmatprep.subr.mxu0 0.0
  %1555 = vmatpush1.msra.mxu0 0.0
  %1556 = vmatprep.subr.mxu0 0.0
  %1557 = vmatpush1.msra.mxu0 0.0
  %1558 = vmatprep.subr.mxu0 0.0
  %1559 = vmatpush1.msra.mxu0 0.0
  %1560 = vmatprep.subr.mxu0 0.0
  %1561 = vmatpush1.msra.mxu0 0.0
  %1562 = vmatprep.subr.mxu0 0.0
  %1563 = vmatpush1.msra.mxu0 0.0
  %1564 = vmatprep.subr.mxu0 0.0
  %1565 = vmatpush1.msra.mxu0 0.0
  %1566 = vmatprep.subr.mxu0 0.0
  %1567 = vmatpush1.msra.mxu0 0.0
  %1568 = vmatprep.subr.mxu0 0.0
  %1569 = vmatpush1.msra.mxu0 0.0
  %1570 = vmatprep.subr.mxu0 0.0
  %1571 = vmatpush1.msra.mxu0 0.0
  %1572 = vmatprep.subr.mxu0 0.0
  %1573 = vmatpush1.msra.mxu0 0.0
  %1574 = vmatprep.mubr.f32.mxu0 0.0
  %1575 = vmatmul.mubr.f32.gmra.mrb[0].mxu0 %v1505
  %v1576 = vpop.f32.mrb[0].mxu0
  %v1577 = vadd.f32 %v457, %v1576
  %v1578 = vpop.f32.mrb[0].mxu0
  %v1579 = vadd.f32 %v461, %v1578
  %1580 = vdwg.mxu0
  %1581 = vmatprep.subr.mxu0 0.0
  %1582 = vmatpush1.msra.mxu0 %v406
  %1583 = vmatprep.subr.mxu0 0.0
  %1584 = vmatpush1.msra.mxu0 %v409
  %1585 = vmatprep.subr.mxu0 0.0
  %1586 = vmatpush1.msra.mxu0 %v412
  %1587 = vmatprep.subr.mxu0 0.0
  %1588 = vmatpush1.msra.mxu0 %v415
  %1589 = vmatprep.subr.mxu0 0.0
  %1590 = vmatpush1.msra.mxu0 %v418
  %1591 = vmatprep.subr.mxu0 0.0
  %1592 = vmatpush1.msra.mxu0 %v421
  %1593 = vmatprep.subr.mxu0 0.0
  %1594 = vmatpush1.msra.mxu0 %v424
  %1595 = vmatprep.subr.mxu0 0.0
  %1596 = vmatpush1.msra.mxu0 %v427
  %1597 = vmatprep.subr.mxu0 0.0
  %1598 = vmatpush1.msra.mxu0 %v430
  %1599 = vmatprep.subr.mxu0 0.0
  %1600 = vmatpush1.msra.mxu0 %v433
  %1601 = vmatprep.subr.mxu0 0.0
  %1602 = vmatpush1.msra.mxu0 %v436
  %1603 = vmatprep.subr.mxu0 0.0
  %1604 = vmatpush1.msra.mxu0 %v439
  %1605 = vmatprep.subr.mxu0 0.0
  %1606 = vmatpush1.msra.mxu0 %v442
  %1607 = vmatprep.subr.mxu0 0.0
  %1608 = vmatpush1.msra.mxu0 %v445
  %1609 = vmatprep.subr.mxu0 0.0
  %1610 = vmatpush1.msra.mxu0 %v448
  %1611 = vmatprep.subr.mxu0 0.0
  %1612 = vmatpush1.msra.mxu0 %v451
  %1613 = vmatprep.subr.mxu0 0.0
  %1614 = vmatpush1.msra.mxu0 0.0
  %1615 = vmatprep.subr.mxu0 0.0
  %1616 = vmatpush1.msra.mxu0 0.0
  %1617 = vmatprep.subr.mxu0 0.0
  %1618 = vmatpush1.msra.mxu0 0.0
  %1619 = vmatprep.subr.mxu0 0.0
  %1620 = vmatpush1.msra.mxu0 0.0
  %1621 = vmatprep.subr.mxu0 0.0
  %1622 = vmatpush1.msra.mxu0 0.0
  %1623 = vmatprep.subr.mxu0 0.0
  %1624 = vmatpush1.msra.mxu0 0.0
  %1625 = vmatprep.subr.mxu0 0.0
  %1626 = vmatpush1.msra.mxu0 0.0
  %1627 = vmatprep.subr.mxu0 0.0
  %1628 = vmatpush1.msra.mxu0 0.0
  %1629 = vmatprep.subr.mxu0 0.0
  %1630 = vmatpush1.msra.mxu0 0.0
  %1631 = vmatprep.subr.mxu0 0.0
  %1632 = vmatpush1.msra.mxu0 0.0
  %1633 = vmatprep.subr.mxu0 0.0
  %1634 = vmatpush1.msra.mxu0 0.0
  %1635 = vmatprep.subr.mxu0 0.0
  %1636 = vmatpush1.msra.mxu0 0.0
  %1637 = vmatprep.subr.mxu0 0.0
  %1638 = vmatpush1.msra.mxu0 0.0
  %1639 = vmatprep.subr.mxu0 0.0
  %1640 = vmatpush1.msra.mxu0 0.0
  %1641 = vmatprep.subr.mxu0 0.0
  %1642 = vmatpush1.msra.mxu0 0.0
  %1643 = vmatprep.subr.mxu0 0.0
  %1644 = vmatpush1.msra.mxu0 0.0
  %1645 = vmatprep.mubr.f32.mxu0 0.0
  %1646 = vmatmul.mubr.f32.gmra.mrb[0].mxu0 %v1505
  %v1647 = vpop.f32.mrb[0].mxu0
  %v1648 = vadd.f32 %v465, %v1647
  %v1649 = vpop.f32.mrb[0].mxu0
  %1650 = vdwg.mxu0
  %v1651 = vadd.f32 %v1507, %v1577
  %v1652 = vxor.u32 %v1651, 2147483648
  %v1653 = vmul.f32 %v1652, 1.442695
  %v1654 = vpow.pop %v1653
  %v1655 = vadd.f32 %v1654, 1.0
  %v1656 = vrcp.pop %v1655
  %v1657 = vmul.f32 1.0, %v1656
  %v1658 = vadd.f32 %v1508, %v1579
  %v1659 = vxor.u32 %v1658, 2147483648
  %v1660 = vmul.f32 %v1659, 1.442695
  %v1661 = vpow.pop %v1660
  %v1662 = vadd.f32 %v1661, 1.0
  %v1663 = vrcp.pop %v1662
  %v1664 = vmul.f32 1.0, %v1663
  %v1665 = vmul.f32 %v1657, %v1648
  %v1666 = vadd.f32 %v1509, %v1665
  %v1667 = vtanh.pop %v1666
  %v1668 = vsub.f32 1.0, %v1664
  %v1669 = vmul.f32 %v1668, %v1667
  %v1670 = vmul.f32 %v1664, %v1505
  %v1671 = vadd.f32 %v1669, %v1670
  %vm1672 = vcmp.gt.s32.totalorder %v32, 6
  %v1673 = vsel %vm1672, 1, 0
  %1674 = vset.pattern.permute.xlu0 0
  %1675 = vperm.xlu0 %1674, %v1673
  %v1676 = vpop.permute.xlu0 %1675
  %vm1677 = vcmp.eq.s32.totalorder %v1676, 1
  %v1678 = vsel %vm1677, %v1671, %v1505
  %s1679 = scalar_lea.vmem [#allocation2], 168
  %v1680 = vld [vmem:[%s1679] sm:$0xff]
  %v1681 = vld [vmem:[%s1679 + $0x8] sm:$0xff]
  %v1682 = vld [vmem:[%s1679 + $0x10] sm:$0xff]
  %1683 = vmatprep.subr.mxu0 %v405
  %1684 = vmatpush1.msra.mxu0 %v404
  %1685 = vmatprep.subr.mxu0 %v408
  %1686 = vmatpush1.msra.mxu0 %v407
  %1687 = vmatprep.subr.mxu0 %v411
  %1688 = vmatpush1.msra.mxu0 %v410
  %1689 = vmatprep.subr.mxu0 %v414
  %1690 = vmatpush1.msra.mxu0 %v413
  %1691 = vmatprep.subr.mxu0 %v417
  %1692 = vmatpush1.msra.mxu0 %v416
  %1693 = vmatprep.subr.mxu0 %v420
  %1694 = vmatpush1.msra.mxu0 %v419
  %1695 = vmatprep.subr.mxu0 %v423
  %1696 = vmatpush1.msra.mxu0 %v422
  %1697 = vmatprep.subr.mxu0 %v426
  %1698 = vmatpush1.msra.mxu0 %v425
  %1699 = vmatprep.subr.mxu0 %v429
  %1700 = vmatpush1.msra.mxu0 %v428
  %1701 = vmatprep.subr.mxu0 %v432
  %1702 = vmatpush1.msra.mxu0 %v431
  %1703 = vmatprep.subr.mxu0 %v435
  %1704 = vmatpush1.msra.mxu0 %v434
  %1705 = vmatprep.subr.mxu0 %v438
  %1706 = vmatpush1.msra.mxu0 %v437
  %1707 = vmatprep.subr.mxu0 %v441
  %1708 = vmatpush1.msra.mxu0 %v440
  %1709 = vmatprep.subr.mxu0 %v444
  %1710 = vmatpush1.msra.mxu0 %v443
  %1711 = vmatprep.subr.mxu0 %v447
  %1712 = vmatpush1.msra.mxu0 %v446
  %1713 = vmatprep.subr.mxu0 %v450
  %1714 = vmatpush1.msra.mxu0 %v449
  %1715 = vmatprep.subr.mxu0 0.0
  %1716 = vmatpush1.msra.mxu0 0.0
  %1717 = vmatprep.subr.mxu0 0.0
  %1718 = vmatpush1.msra.mxu0 0.0
  %1719 = vmatprep.subr.mxu0 0.0
  %1720 = vmatpush1.msra.mxu0 0.0
  %1721 = vmatprep.subr.mxu0 0.0
  %1722 = vmatpush1.msra.mxu0 0.0
  %1723 = vmatprep.subr.mxu0 0.0
  %1724 = vmatpush1.msra.mxu0 0.0
  %1725 = vmatprep.subr.mxu0 0.0
  %1726 = vmatpush1.msra.mxu0 0.0
  %1727 = vmatprep.subr.mxu0 0.0
  %1728 = vmatpush1.msra.mxu0 0.0
  %1729 = vmatprep.subr.mxu0 0.0
  %1730 = vmatpush1.msra.mxu0 0.0
  %1731 = vmatprep.subr.mxu0 0.0
  %1732 = vmatpush1.msra.mxu0 0.0
  %1733 = vmatprep.subr.mxu0 0.0
  %1734 = vmatpush1.msra.mxu0 0.0
  %1735 = vmatprep.subr.mxu0 0.0
  %1736 = vmatpush1.msra.mxu0 0.0
  %1737 = vmatprep.subr.mxu0 0.0
  %1738 = vmatpush1.msra.mxu0 0.0
  %1739 = vmatprep.subr.mxu0 0.0
  %1740 = vmatpush1.msra.mxu0 0.0
  %1741 = vmatprep.subr.mxu0 0.0
  %1742 = vmatpush1.msra.mxu0 0.0
  %1743 = vmatprep.subr.mxu0 0.0
  %1744 = vmatpush1.msra.mxu0 0.0
  %1745 = vmatprep.subr.mxu0 0.0
  %1746 = vmatpush1.msra.mxu0 0.0
  %1747 = vmatprep.mubr.f32.mxu0 0.0
  %1748 = vmatmul.mubr.f32.gmra.mrb[0].mxu0 %v1678
  %v1749 = vpop.f32.mrb[0].mxu0
  %v1750 = vadd.f32 %v457, %v1749
  %v1751 = vpop.f32.mrb[0].mxu0
  %v1752 = vadd.f32 %v461, %v1751
  %1753 = vdwg.mxu0
  %1754 = vmatprep.subr.mxu0 0.0
  %1755 = vmatpush1.msra.mxu0 %v406
  %1756 = vmatprep.subr.mxu0 0.0
  %1757 = vmatpush1.msra.mxu0 %v409
  %1758 = vmatprep.subr.mxu0 0.0
  %1759 = vmatpush1.msra.mxu0 %v412
  %1760 = vmatprep.subr.mxu0 0.0
  %1761 = vmatpush1.msra.mxu0 %v415
  %1762 = vmatprep.subr.mxu0 0.0
  %1763 = vmatpush1.msra.mxu0 %v418
  %1764 = vmatprep.subr.mxu0 0.0
  %1765 = vmatpush1.msra.mxu0 %v421
  %1766 = vmatprep.subr.mxu0 0.0
  %1767 = vmatpush1.msra.mxu0 %v424
  %1768 = vmatprep.subr.mxu0 0.0
  %1769 = vmatpush1.msra.mxu0 %v427
  %1770 = vmatprep.subr.mxu0 0.0
  %1771 = vmatpush1.msra.mxu0 %v430
  %1772 = vmatprep.subr.mxu0 0.0
  %1773 = vmatpush1.msra.mxu0 %v433
  %1774 = vmatprep.subr.mxu0 0.0
  %1775 = vmatpush1.msra.mxu0 %v436
  %1776 = vmatprep.subr.mxu0 0.0
  %1777 = vmatpush1.msra.mxu0 %v439
  %1778 = vmatprep.subr.mxu0 0.0
  %1779 = vmatpush1.msra.mxu0 %v442
  %1780 = vmatprep.subr.mxu0 0.0
  %1781 = vmatpush1.msra.mxu0 %v445
  %1782 = vmatprep.subr.mxu0 0.0
  %1783 = vmatpush1.msra.mxu0 %v448
  %1784 = vmatprep.subr.mxu0 0.0
  %1785 = vmatpush1.msra.mxu0 %v451
  %1786 = vmatprep.subr.mxu0 0.0
  %1787 = vmatpush1.msra.mxu0 0.0
  %1788 = vmatprep.subr.mxu0 0.0
  %1789 = vmatpush1.msra.mxu0 0.0
  %1790 = vmatprep.subr.mxu0 0.0
  %1791 = vmatpush1.msra.mxu0 0.0
  %1792 = vmatprep.subr.mxu0 0.0
  %1793 = vmatpush1.msra.mxu0 0.0
  %1794 = vmatprep.subr.mxu0 0.0
  %1795 = vmatpush1.msra.mxu0 0.0
  %1796 = vmatprep.subr.mxu0 0.0
  %1797 = vmatpush1.msra.mxu0 0.0
  %1798 = vmatprep.subr.mxu0 0.0
  %1799 = vmatpush1.msra.mxu0 0.0
  %1800 = vmatprep.subr.mxu0 0.0
  %1801 = vmatpush1.msra.mxu0 0.0
  %1802 = vmatprep.subr.mxu0 0.0
  %1803 = vmatpush1.msra.mxu0 0.0
  %1804 = vmatprep.subr.mxu0 0.0
  %1805 = vmatpush1.msra.mxu0 0.0
  %1806 = vmatprep.subr.mxu0 0.0
  %1807 = vmatpush1.msra.mxu0 0.0
  %1808 = vmatprep.subr.mxu0 0.0
  %1809 = vmatpush1.msra.mxu0 0.0
  %1810 = vmatprep.subr.mxu0 0.0
  %1811 = vmatpush1.msra.mxu0 0.0
  %1812 = vmatprep.subr.mxu0 0.0
  %1813 = vmatpush1.msra.mxu0 0.0
  %1814 = vmatprep.subr.mxu0 0.0
  %1815 = vmatpush1.msra.mxu0 0.0
  %1816 = vmatprep.subr.mxu0 0.0
  %1817 = vmatpush1.msra.mxu0 0.0
  %1818 = vmatprep.mubr.f32.mxu0 0.0
  %1819 = vmatmul.mubr.f32.gmra.mrb[0].mxu0 %v1678
  %v1820 = vpop.f32.mrb[0].mxu0
  %v1821 = vadd.f32 %v465, %v1820
  %v1822 = vpop.f32.mrb[0].mxu0
  %1823 = vdwg.mxu0
  %v1824 = vadd.f32 %v1680, %v1750
  %v1825 = vxor.u32 %v1824, 2147483648
  %v1826 = vmul.f32 %v1825, 1.442695
  %v1827 = vpow.pop %v1826
  %v1828 = vadd.f32 %v1827, 1.0
  %v1829 = vrcp.pop %v1828
  %v1830 = vmul.f32 1.0, %v1829
  %v1831 = vadd.f32 %v1681, %v1752
  %v1832 = vxor.u32 %v1831, 2147483648
  %v1833 = vmul.f32 %v1832, 1.442695
  %v1834 = vpow.pop %v1833
  %v1835 = vadd.f32 %v1834, 1.0
  %v1836 = vrcp.pop %v1835
  %v1837 = vmul.f32 1.0, %v1836
  %v1838 = vmul.f32 %v1830, %v1821
  %v1839 = vadd.f32 %v1682, %v1838
  %v1840 = vtanh.pop %v1839
  %v1841 = vsub.f32 1.0, %v1837
  %v1842 = vmul.f32 %v1841, %v1840
  %v1843 = vmul.f32 %v1837, %v1678
  %v1844 = vadd.f32 %v1842, %v1843
  %vm1845 = vcmp.gt.s32.totalorder %v32, 7
  %v1846 = vsel %vm1845, 1, 0
  %1847 = vset.pattern.permute.xlu0 0
  %1848 = vperm.xlu0 %1847, %v1846
  %v1849 = vpop.permute.xlu0 %1848
  %vm1850 = vcmp.eq.s32.totalorder %v1849, 1
  %v1851 = vsel %vm1850, %v1844, %v1678
  %v1852 = vld [vmem:[%s6] sm:$0xff]
  %v1853 = vld [vmem:[%s6 + $0x8] sm:$0xff]
  %v1854 = vld [vmem:[%s6 + $0x10] sm:$0xff]
  %v1855 = vld [vmem:[%s6 + $0x18] sm:$0xff]
  %v1856 = vld [vmem:[%s6 + $0x20] sm:$0xff]
  %v1857 = vld [vmem:[%s6 + $0x28] sm:$0xff]
  %v1858 = vld [vmem:[%s6 + $0x30] sm:$0xff]
  %v1859 = vld [vmem:[%s6 + $0x38] sm:$0xff]
  %v1860 = vld [vmem:[%s6 + $0x40] sm:$0xff]
  %v1861 = vld [vmem:[%s6 + $0x48] sm:$0xff]
  %v1862 = vld [vmem:[%s6 + $0x50] sm:$0xff]
  %v1863 = vld [vmem:[%s6 + $0x58] sm:$0xff]
  %v1864 = vld [vmem:[%s6 + $0x60] sm:$0xff]
  %v1865 = vld [vmem:[%s6 + $0x68] sm:$0xff]
  %v1866 = vld [vmem:[%s6 + $0x70] sm:$0xff]
  %v1867 = vld [vmem:[%s6 + $0x78] sm:$0xff]
  %v1868 = vld [vmem:[%s7] sm:$0x1]
  %v1870 = vlaneseq
  %v1871 = vshrl.u32 %v1870, 7
  %v1872 = vsub.s32 0, %v1871
  %v1873 = vrot.slane %v1868, %v1872
  %1875 = vmatprep.subr.mxu0 0.0
  %1876 = vmatpush1.msra.mxu0 %v1852
  %1877 = vmatprep.subr.mxu0 0.0
  %1878 = vmatpush1.msra.mxu0 %v1853
  %1879 = vmatprep.subr.mxu0 0.0
  %1880 = vmatpush1.msra.mxu0 %v1854
  %1881 = vmatprep.subr.mxu0 0.0
  %1882 = vmatpush1.msra.mxu0 %v1855
  %1883 = vmatprep.subr.mxu0 0.0
  %1884 = vmatpush1.msra.mxu0 %v1856
  %1885 = vmatprep.subr.mxu0 0.0
  %1886 = vmatpush1.msra.mxu0 %v1857
  %1887 = vmatprep.subr.mxu0 0.0
  %1888 = vmatpush1.msra.mxu0 %v1858
  %1889 = vmatprep.subr.mxu0 0.0
  %1890 = vmatpush1.msra.mxu0 %v1859
  %1891 = vmatprep.subr.mxu0 0.0
  %1892 = vmatpush1.msra.mxu0 %v1860
  %1893 = vmatprep.subr.mxu0 0.0
  %1894 = vmatpush1.msra.mxu0 %v1861
  %1895 = vmatprep.subr.mxu0 0.0
  %1896 = vmatpush1.msra.mxu0 %v1862
  %1897 = vmatprep.subr.mxu0 0.0
  %1898 = vmatpush1.msra.mxu0 %v1863
  %1899 = vmatprep.subr.mxu0 0.0
  %1900 = vmatpush1.msra.mxu0 %v1864
  %1901 = vmatprep.subr.mxu0 0.0
  %1902 = vmatpush1.msra.mxu0 %v1865
  %1903 = vmatprep.subr.mxu0 0.0
  %1904 = vmatpush1.msra.mxu0 %v1866
  %1905 = vmatprep.subr.mxu0 0.0
  %1906 = vmatpush1.msra.mxu0 %v1867
  %1907 = vmatprep.subr.mxu0 0.0
  %1908 = vmatpush1.msra.mxu0 0.0
  %1909 = vmatprep.subr.mxu0 0.0
  %1910 = vmatpush1.msra.mxu0 0.0
  %1911 = vmatprep.subr.mxu0 0.0
  %1912 = vmatpush1.msra.mxu0 0.0
  %1913 = vmatprep.subr.mxu0 0.0
  %1914 = vmatpush1.msra.mxu0 0.0
  %1915 = vmatprep.subr.mxu0 0.0
  %1916 = vmatpush1.msra.mxu0 0.0
  %1917 = vmatprep.subr.mxu0 0.0
  %1918 = vmatpush1.msra.mxu0 0.0
  %1919 = vmatprep.subr.mxu0 0.0
  %1920 = vmatpush1.msra.mxu0 0.0
  %1921 = vmatprep.subr.mxu0 0.0
  %1922 = vmatpush1.msra.mxu0 0.0
  %1923 = vmatprep.subr.mxu0 0.0
  %1924 = vmatpush1.msra.mxu0 0.0
  %1925 = vmatprep.subr.mxu0 0.0
  %1926 = vmatpush1.msra.mxu0 0.0
  %1927 = vmatprep.subr.mxu0 0.0
  %1928 = vmatpush1.msra.mxu0 0.0
  %1929 = vmatprep.subr.mxu0 0.0
  %1930 = vmatpush1.msra.mxu0 0.0
  %1931 = vmatprep.subr.mxu0 0.0
  %1932 = vmatpush1.msra.mxu0 0.0
  %1933 = vmatprep.subr.mxu0 0.0
  %1934 = vmatpush1.msra.mxu0 0.0
  %1935 = vmatprep.subr.mxu0 0.0
  %1936 = vmatpush1.msra.mxu0 0.0
  %1937 = vmatprep.subr.mxu0 0.0
  %1938 = vmatpush1.msra.mxu0 0.0
  %1939 = vmatprep.mubr.f32.mxu0 0.0
  %1940 = vmatmul.mubr.f32.gmra.mrb[0].mxu0 %v1851
  %v1941 = vpop.f32.mrb[0].mxu0
  %v1942 = vadd.f32 %v1873, %v1941
  %v1943 = vpop.f32.mrb[0].mxu0
  %1944 = vdwg.mxu0
  %vm1945 = vcmp.eq.f32.partialorder %v403, 0.0
  %1947 = vrot.lane.b32.xlu0 %v1942, 10
  %v1948 = vpop.permute.xlu0 %1947
  %v1950 = vsel %vm1945, -100000.0, %v1948
  %vm1951 = vcmp.eq.f32.partialorder %v1950, -100000.0
  %v1952 = vsel %vm1951, 1.0, 0.0
  %vm1953 = vcmask 113744
  %v1954 = vsel %vm1953, %v1952, inf
  %1955 = vmin.xlane.f32.xlu0 %v1954
  %v1956 = vpop.xlane.xlu0 %1955
  %vm1957 = vcmp.gt.f32.partialorder %v1956, 0.0
  %v1958 = vsel %vm1957, 1, 0
  %vm1959 = vcmp.eq.s32.totalorder %v1958, 1
  %v1960 = vsel %vm1959, 0.0, %v1950
  %1962 = vrot.lane.b32.xlu0 %v403, 127
  %v1963 = vpop.permute.xlu0 %1962
  %v1965 = vadd.f32 %v403, %v1963
  %v1966 = vmul.f32 %v1965, 0.5
  %v1967 = vlaneseq
  %v1968 = vand.u32 %v1967, 127
  %v1969 = vld [vmem:[%s8] sm:$0x1]
  %1970 = vset.pattern.permute.xlu0 16
  %1971 = vperm.xlu0 %1970, %v403
  %v1972 = vpop.permute.xlu0 %1971
  %v1975 = vlaneseq
  %v1976 = vshrl.u32 %v1975, 7
  %v1977 = vsub.s32 0, %v1976
  %v1978 = vrot.slane %v1969, %v1977
  %v1980 = vmul.f32 %v1972, %v1978
  %vm1981 = vcmp.eq.s32.totalorder %v1968, 0
  %1982 = vset.pattern.permute.xlu0 14
  %1983 = vperm.xlu0 %1982, %v403
  %v1984 = vpop.permute.xlu0 %1983
  %v1986 = vsel %vm1981, %v1984, %v1980
  %vm1987 = vcmp.eq.s32.totalorder %v1968, 1
  %1989 = vset.pattern.permute.xlu0 14
  %1990 = vperm.xlu0 %1989, %v1966
  %v1991 = vpop.permute.xlu0 %1990
  %v1993 = vsel %vm1987, %v1991, %v1986
  %vm1994 = vcmp.eq.s32.totalorder %v1968, 2
  %1995 = vset.pattern.permute.xlu0 15
  %1996 = vperm.xlu0 %1995, %v403
  %v1997 = vpop.permute.xlu0 %1996
  %v1999 = vsel %vm1994, %v1997, %v1993
  %vm2000 = vcmp.gt.f32.partialorder %v1984, %v1999
  %vm2001 = vcmp.lt.f32.partialorder %v1997, %v1999
  %vm2002 = vmor %vm2000, %vm2001
  %2003 = vrot.lane.b32.xlu0 %v1942, 124
  %v2004 = vpop.permute.xlu0 %2003
  %v2006 = vsel %vm2002, -100000.0, %v2004
  %vm2007 = vcmp.eq.f32.partialorder %v2006, -100000.0
  %v2008 = vsel %vm2007, 1.0, 0.0
  %vm2009 = vcmask 64512
  %v2010 = vsel %vm2009, %v2008, inf
  %2011 = vmin.xlane.f32.xlu0 %v2010
  %v2012 = vpop.xlane.xlu0 %2011
  %vm2013 = vcmp.gt.f32.partialorder %v2012, 0.0
  %v2014 = vsel %vm2013, 1, 0
  %vm2015 = vcmp.eq.s32.totalorder %v2014, 1
  %v2016 = vsel %vm2015, 0.0, %v2006
  %v2017 = vsel %vm1945, 1, 0
  %2018 = vset.pattern.permute.xlu0 12
  %2019 = vperm.xlu0 %2018, %v2017
  %v2020 = vpop.permute.xlu0 %2019
  %vm2021 = vcmp.eq.s32.totalorder %v2020, 1
  %v2022 = vsel %vm2021, -100000.0, %v2016
  %v2023 = vsel %vm1953, %v1960, -inf
  %2024 = vmax.xlane.f32.xlu0 %v2023
  %v2025 = vpop.xlane.xlu0 %2024
  %v2026 = vsub.f32 %v1960, %v2025
  %v2027 = vmul.f32 %v2026, 1.442695
  %v2028 = vpow.pop %v2027
  %2030 = vrot.lane.b32.xlu0 %v2028, 118
  %v2031 = vpop.permute.xlu0 %2030
  %vm2033 = vcmask 31744
  %v2034 = vsel %vm2033, %v2031, 0.0
  %2035 = vadd.xlane.f32.xlu0 %v2034
  %v2036 = vpop.xlane.xlu0 %2035
  %v2037 = vlog2.pop %v2036
  %v2038 = vmul.f32 %v2037, 0.6931472
  %v2039 = vsub.f32 %v2026, %v2038
  %v2040 = vsel %vm2009, %v2022, -inf
  %2041 = vmax.xlane.f32.xlu0 %v2040
  %v2042 = vpop.xlane.xlu0 %2041
  %v2043 = vsub.f32 %v2022, %v2042
  %v2044 = vmul.f32 %v2043, 1.442695
  %v2045 = vpow.pop %v2044
  %v2046 = vsel %vm2009, %v2045, 0.0
  %2047 = vadd.xlane.f32.xlu0 %v2046
  %v2048 = vpop.xlane.xlu0 %2047
  %v2049 = vlog2.pop %v2048
  %v2050 = vmul.f32 %v2049, 0.6931472
  %v2051 = vsub.f32 %v2043, %v2050
  %2053 = vrot.lane.b32.xlu0 %v2039, 118
  %v2054 = vpop.permute.xlu0 %2053
  %2057 = vrot.lane.b32.xlu0 %v2051, 4
  %v2058 = vpop.permute.xlu0 %2057
  %v2060 = vsel %vm2033, %v2054, %v2058
  %vm2061 = vcmask 97280
  %v2062 = vsel %vm2061, %v2060, %v1942
  %vm2063 = vcmask 105472
  %v2064 = vsel %vm2063, %v2062, 0.0
  %2065 = vst [vmem:[%s9] sm:$0xff] %v2064
  // Predicated region
  $region38: #{evaluator_network_forward.1} parent=0 // pred_check
    _
  $region39: #{evaluator_network_forward.1} parent=0 // pred_check_branch
    %2067 = sbr.rel (0) target = $region41
  $region40: #{evaluator_network_forward.1} parent=0 // pred_region
    _
  $region41: #{evaluator_network_forward.1} parent=0 // pred_fallthru
    _
  // Predicated region
  $region42: #{evaluator_network_forward.1} parent=0 // pred_check
    _
  $region43: #{evaluator_network_forward.1} parent=0 // pred_check_branch
    %2069 = sbr.rel (0) target = $region45
  $region44: #{evaluator_network_forward.1} parent=0 // pred_region
    _
  $region45: #{evaluator_network_forward.1} parent=0 // pred_fallthru
    _

</llo_original>
